<compile_context>
chip_gen: v7x
topology: tpu7x:2x2x1
jax: 0.10.0
libtpu: 0.0.40
codegen_flags: <defaults>
</compile_context>

<pallas_src>
import functools

import jax
import jax.numpy as jnp
from jax.experimental import pallas as pl
from jax.experimental.pallas import tpu as pltpu

_NEG_INF = -1e30  # finite mask value folded into padded output-bias lanes


def _round_up(n, m):
    return ((n + m - 1) // m) * m


def _cdiv(a, b):
    return (a + b - 1) // b


def _pad_cols(a, cols, value=0.0):
    return jnp.pad(a, ((0, 0), (0, cols - a.shape[1])), constant_values=value)


def _pad2d(a, rows, cols):
    r, c = a.shape
    return jnp.pad(a, ((0, rows - r), (0, cols - c)))


def _log_softmax(logits):
    # Padded class lanes arrive at ~-1e30 (bias fold), so exp(shifted) underflows to 0
    # there and they never affect max / sum. No per-tile iota/where masking needed.
    m = jnp.max(logits, axis=-1, keepdims=True)
    shifted = logits - m
    lse = jnp.log(jnp.sum(jnp.exp(shifted), axis=-1, keepdims=True))
    return shifted - lse


def _ffnn_kernel_2layer(x_ref, w1_ref, b1_ref, w2_ref, b2_ref, wo_ref, bo_ref, out_ref):
    mm = w1_ref.dtype  # MXU operand dtype (bf16 or f32); accumulation always f32
    h = jnp.dot(x_ref[...], w1_ref[...], preferred_element_type=jnp.float32) + b1_ref[...]
    h = jnp.maximum(h, 0.0)
    h = jnp.dot(h.astype(mm), w2_ref[...], preferred_element_type=jnp.float32) + b2_ref[...]
    h = jnp.maximum(h, 0.0)
    logits = jnp.dot(h.astype(mm), wo_ref[...], preferred_element_type=jnp.float32) + bo_ref[...]
    out_ref[...] = _log_softmax(logits).astype(out_ref.dtype)


def _ffnn_kernel_1layer(x_ref, w1_ref, b1_ref, wo_ref, bo_ref, out_ref):
    mm = w1_ref.dtype
    h = jnp.dot(x_ref[...], w1_ref[...], preferred_element_type=jnp.float32) + b1_ref[...]
    h = jnp.maximum(h, 0.0)
    logits = jnp.dot(h.astype(mm), wo_ref[...], preferred_element_type=jnp.float32) + bo_ref[...]
    out_ref[...] = _log_softmax(logits).astype(out_ref.dtype)


def _batch_tiling(batch, tb_max):
    """Pick (tb, n_tiles): big tiles to amortize per-step overhead, an even tile count so
    v7x's two TensorCores load-balance, and no batch padding in the single-tile case."""
    if batch <= tb_max:
        return batch, 1                 # one full-extent block (block dim == array dim)
    n_tiles = _cdiv(batch, tb_max)
    if n_tiles % 2 == 1:
        n_tiles += 1                    # even tile count -> balanced across 2 TCs on v7x
    tb = _round_up(_cdiv(batch, n_tiles), 8)
    return tb, n_tiles


@functools.partial(jax.jit,
                   static_argnames=("second_layer", "tb_max", "use_bf16", "out_dtype"))
def ffnn_forward(x, params, *, second_layer, tb_max=512, use_bf16=True,
                 out_dtype=jnp.bfloat16):
    batch, vocab = x.shape
    mm_dtype = jnp.bfloat16 if use_bf16 else jnp.float32

    if second_layer:
        w1, b1, w2, b2, wo, bo = params
    else:
        w1, b1, wo, bo = params
        w2 = b2 = None
    b1 = jnp.reshape(b1, (1, -1))
    bo = jnp.reshape(bo, (1, -1))
    n_classes = bo.shape[-1]

    # Lane-dense feature axes (multiples of 128). Batch is NOT padded.
    vp = _round_up(vocab, 128)
    h1p = _round_up(w1.shape[1], 128)
    cp = _round_up(n_classes, 128)

    tb, n_tiles = _batch_tiling(batch, tb_max)

    # Only the vocab axis of x is padded/cast (no batch round-up, no extra batch rows).
    # Zero-padding is exact: padded x columns hit zero w1 rows; padded hidden units are
    # relu(0 + 0) = 0 and feed zero rows of the next weight; padded class lanes get a
    # -1e30 bias so they vanish from the softmax.
    # TODO(synk): for very large x, CompilerParams(allow_input_fusion=...) could fuse this
    # pad/cast into the pallas_call operand and avoid materializing x_p entirely.
    x_p = _pad_cols(x, vp).astype(mm_dtype)
    w1_p = _pad2d(w1, vp, h1p).astype(mm_dtype)
    b1_p = _pad_cols(b1, h1p).astype(jnp.float32)
    bo_p = _pad_cols(bo.astype(jnp.float32), cp, value=_NEG_INF)

    if second_layer:
        b2 = jnp.reshape(b2, (1, -1))
        h2p = _round_up(w2.shape[1], 128)
        w2_p = _pad2d(w2, h1p, h2p).astype(mm_dtype)
        b2_p = _pad_cols(b2, h2p).astype(jnp.float32)
        wo_p = _pad2d(wo, h2p, cp).astype(mm_dtype)
        operands = (x_p, w1_p, b1_p, w2_p, b2_p, wo_p, bo_p)
        kernel = _ffnn_kernel_2layer
        flops = 2 * n_tiles * tb * (vp * h1p + h1p * h2p + h2p * cp)
    else:
        wo_p = _pad2d(wo, h1p, cp).astype(mm_dtype)
        operands = (x_p, w1_p, b1_p, wo_p, bo_p)
        kernel = _ffnn_kernel_1layer
        flops = 2 * n_tiles * tb * (vp * h1p + h1p * cp)

    def resident(shape):
        # Whole array as one block, same block index every grid step -> stays in VMEM.
        return pl.BlockSpec(shape, lambda i: (0,) * len(shape))

    in_specs = [pl.BlockSpec((tb, vp), lambda i: (i, 0))]     # x: tiled over batch only
    in_specs += [resident(op.shape) for op in operands[1:]]   # weights/biases resident
    out_specs = pl.BlockSpec((tb, cp), lambda i: (i, 0))      # lane-dense output tile

    out_bytes = batch * cp * jnp.dtype(out_dtype).itemsize
    bytes_accessed = sum(int(op.size) * op.dtype.itemsize for op in operands) + out_bytes
    cost = pl.CostEstimate(
        flops=int(flops),
        transcendentals=int(n_tiles * tb * (cp + 1)),   # exp per logit lane + log per row
        bytes_accessed=int(bytes_accessed),
    )

    out_padded = pl.pallas_call(
        kernel,
        out_shape=jax.ShapeDtypeStruct((batch, cp), out_dtype),
        grid_spec=pltpu.PrefetchScalarGridSpec(
            num_scalar_prefetch=0,
            grid=(n_tiles,),
            in_specs=in_specs,
            out_specs=out_specs,
        ),
        compiler_params=pltpu.CompilerParams(
            dimension_semantics=("parallel",),     # batch tiles shard across TCs on v7x
            vmem_limit_bytes=32 * 1024 * 1024,     # explicit headroom for resident weights
        ),
        cost_estimate=cost,
    )(*operands)

    # NOTE: at realistic bag-of-words vocab sizes (>=30k) the resident w1 block should be
    # single-buffered (pipeline_mode=pl.Buffered(1)) or K-tiled with an f32 accumulator to
    # stay inside v7x's 64 MiB VMEM; at these sizes (<200 KiB of weights) resident wins.
    return out_padded[:, :n_classes]


def init_params(key, vocab_size, n_classes, hidden_1=32, hidden_2=None):
    """Deterministic init mimicking nn.Linear's U(-1/sqrt(fan_in), 1/sqrt(fan_in))."""
    def linear(k, fan_in, fan_out):
        kw, kb = jax.random.split(k)
        bound = 1.0 / jnp.sqrt(float(fan_in))
        w = jax.random.uniform(kw, (fan_in, fan_out), jnp.float32, -bound, bound)
        b = jax.random.uniform(kb, (1, fan_out), jnp.float32, -bound, bound)
        return w, b

    if hidden_2:
        k1, k2, k3 = jax.random.split(key, 3)
        w1, b1 = linear(k1, vocab_size, hidden_1)
        w2, b2 = linear(k2, hidden_1, hidden_2)
        wo, bo = linear(k3, hidden_2, n_classes)
        return (w1, b1, w2, b2, wo, bo), True
    else:
        k1, k3 = jax.random.split(key, 2)
        w1, b1 = linear(k1, vocab_size, hidden_1)
        wo, bo = linear(k3, hidden_1, n_classes)
        return (w1, b1, wo, bo), False


def reference_forward(x, params, second_layer, use_bf16=True):
    """Pure-JAX reference using the same operand dtype / f32-accumulate matmuls."""
    mm = jnp.bfloat16 if use_bf16 else jnp.float32
    prec = None if use_bf16 else jax.lax.Precision.HIGHEST

    def dense(a, w, b):
        return jnp.dot(a.astype(mm), w.astype(mm),
                       preferred_element_type=jnp.float32, precision=prec) + b

    if second_layer:
        w1, b1, w2, b2, wo, bo = params
        h = jnp.maximum(dense(x, w1, b1), 0.0)
        h = jnp.maximum(dense(h, w2, b2), 0.0)
    else:
        w1, b1, wo, bo = params
        h = jnp.maximum(dense(x, w1, b1), 0.0)
    logits = dense(h, wo, bo)
    return jax.nn.log_softmax(logits, axis=1)


if __name__ == "__main__":
    key = jax.random.PRNGKey(0)
    kx, kp = jax.random.split(key)

    # Small shapes consistent with the module (bag-of-words FFNN):
    #   FFNN(vocab_size=200, n_classes=10, extra_arg_1=32, extra_arg_2=16)
    # batch/vocab deliberately NOT multiples of 8/128 to exercise the no-pad batch path
    # and the vocab-lane padding.
    batch, vocab_size, n_classes = 300, 200, 10
    hidden_1, hidden_2 = 32, 16

    x = jax.random.normal(kx, (batch, vocab_size), dtype=jnp.float32)

    # Two-hidden-layer configuration: default fast path (bf16 MXU operands, bf16 log-prob
    # output, single full-extent 300-row batch block).
    params2, second_layer2 = init_params(kp, vocab_size, n_classes, hidden_1, hidden_2)
    out2 = jax.block_until_ready(ffnn_forward(x, params2, second_layer=second_layer2))
    ref2 = reference_forward(x, params2, second_layer2, use_bf16=True)
    assert out2.shape == (batch, n_classes)
    assert out2.dtype == jnp.bfloat16
    out2_f32 = out2.astype(jnp.float32)
    assert bool(jnp.all(jnp.isfinite(out2_f32)))
    assert jnp.allclose(out2_f32, ref2, atol=3e-2, rtol=3e-2), "2-layer mismatch vs reference"

    # Single-hidden-layer configuration: f32 output, small tb_max to exercise the
    # multi-tile path (even grid of 4 tiles of 80 rows, ragged last tile dropped rows).
    params1, second_layer1 = init_params(kp, vocab_size, n_classes, hidden_1, None)
    out1 = jax.block_until_ready(
        ffnn_forward(x, params1, second_layer=second_layer1,
                     tb_max=128, use_bf16=True, out_dtype=jnp.float32))
    ref1 = reference_forward(x, params1, second_layer1, use_bf16=True)
    assert out1.shape == (batch, n_classes)
    assert out1.dtype == jnp.float32
    assert bool(jnp.all(jnp.isfinite(out1)))
    assert jnp.allclose(out1, ref1, atol=1e-4, rtol=1e-4), "1-layer mismatch vs reference"

    print("KERNEL_OK")
</pallas_src>

<mosaic_0001>
module attributes {stable_mosaic.version = 11 : i64} {
  func.func @_ffnn_kernel_2layer(%arg0: i32, %arg1: memref<300x256xbf16, #tpu.memory_space<vmem>>, %arg2: memref<256x128xbf16, #tpu.memory_space<vmem>>, %arg3: memref<1x128xf32, #tpu.memory_space<vmem>>, %arg4: memref<128x128xbf16, #tpu.memory_space<vmem>>, %arg5: memref<1x128xf32, #tpu.memory_space<vmem>>, %arg6: memref<128x128xbf16, #tpu.memory_space<vmem>>, %arg7: memref<1x128xf32, #tpu.memory_space<vmem>>, %arg8: memref<300x128xbf16, #tpu.memory_space<vmem>>) attributes {dimension_semantics = [#tpu.dimension_semantics<parallel>], iteration_bounds = array<i64: 1>, scalar_prefetch = 0 : i64, scratch_operands = 0 : i64, tpu.core_type = #tpu.core_type<tc>, window_params = [{transform_indices = @transform_0, window_bounds = array<i64: 300, 256>}, {pipeline_mode = #tpu.pipeline_mode<synchronous>, transform_indices = @transform_1, window_bounds = array<i64: 256, 128>}, {pipeline_mode = #tpu.pipeline_mode<synchronous>, transform_indices = @transform_2, window_bounds = array<i64: 1, 128>}, {pipeline_mode = #tpu.pipeline_mode<synchronous>, transform_indices = @transform_3, window_bounds = array<i64: 128, 128>}, {pipeline_mode = #tpu.pipeline_mode<synchronous>, transform_indices = @transform_4, window_bounds = array<i64: 1, 128>}, {pipeline_mode = #tpu.pipeline_mode<synchronous>, transform_indices = @transform_5, window_bounds = array<i64: 128, 128>}, {pipeline_mode = #tpu.pipeline_mode<synchronous>, transform_indices = @transform_6, window_bounds = array<i64: 1, 128>}, {transform_indices = @transform_7, window_bounds = array<i64: 300, 128>}]} {
    %c0 = arith.constant 0 : index
    %c0_0 = arith.constant 0 : index
    %0 = vector.load %arg1[%c0, %c0_0] : memref<300x256xbf16, #tpu.memory_space<vmem>>, vector<300x256xbf16>
    %c0_1 = arith.constant 0 : index
    %c0_2 = arith.constant 0 : index
    %1 = vector.load %arg2[%c0_1, %c0_2] : memref<256x128xbf16, #tpu.memory_space<vmem>>, vector<256x128xbf16>
    %cst = arith.constant dense<0.000000e+00> : vector<300x128xf32>
    %2 = tpu.matmul %0, %1, %cst {dimension_numbers = #tpu.dot_dimension_numbers<[1], [0], [0], [1], [0, 0, 1, 1], [], []>} : vector<300x256xbf16>, vector<256x128xbf16>, vector<300x128xf32> -> vector<300x128xf32>
    %c0_3 = arith.constant 0 : index
    %c0_4 = arith.constant 0 : index
    %3 = vector.load %arg3[%c0_3, %c0_4] : memref<1x128xf32, #tpu.memory_space<vmem>>, vector<1x128xf32>
    %4 = vector.broadcast %3 : vector<1x128xf32> to vector<300x128xf32>
    %5 = arith.addf %2, %4 : vector<300x128xf32>
    %cst_5 = arith.constant 0.000000e+00 : f32
    %6 = vector.broadcast %cst_5 : f32 to vector<300x128xf32>
    %7 = arith.maximumf %5, %6 : vector<300x128xf32>
    %8 = arith.truncf %7 : vector<300x128xf32> to vector<300x128xbf16>
    %c0_6 = arith.constant 0 : index
    %c0_7 = arith.constant 0 : index
    %9 = vector.load %arg4[%c0_6, %c0_7] : memref<128x128xbf16, #tpu.memory_space<vmem>>, vector<128x128xbf16>
    %cst_8 = arith.constant dense<0.000000e+00> : vector<300x128xf32>
    %10 = tpu.matmul %8, %9, %cst_8 {dimension_numbers = #tpu.dot_dimension_numbers<[1], [0], [0], [1], [0, 0, 1, 1], [], []>} : vector<300x128xbf16>, vector<128x128xbf16>, vector<300x128xf32> -> vector<300x128xf32>
    %c0_9 = arith.constant 0 : index
    %c0_10 = arith.constant 0 : index
    %11 = vector.load %arg5[%c0_9, %c0_10] : memref<1x128xf32, #tpu.memory_space<vmem>>, vector<1x128xf32>
    %12 = vector.broadcast %11 : vector<1x128xf32> to vector<300x128xf32>
    %13 = arith.addf %10, %12 : vector<300x128xf32>
    %cst_11 = arith.constant 0.000000e+00 : f32
    %14 = vector.broadcast %cst_11 : f32 to vector<300x128xf32>
    %15 = arith.maximumf %13, %14 : vector<300x128xf32>
    %16 = arith.truncf %15 : vector<300x128xf32> to vector<300x128xbf16>
    %c0_12 = arith.constant 0 : index
    %c0_13 = arith.constant 0 : index
    %17 = vector.load %arg6[%c0_12, %c0_13] : memref<128x128xbf16, #tpu.memory_space<vmem>>, vector<128x128xbf16>
    %cst_14 = arith.constant dense<0.000000e+00> : vector<300x128xf32>
    %18 = tpu.matmul %16, %17, %cst_14 {dimension_numbers = #tpu.dot_dimension_numbers<[1], [0], [0], [1], [0, 0, 1, 1], [], []>} : vector<300x128xbf16>, vector<128x128xbf16>, vector<300x128xf32> -> vector<300x128xf32>
    %c0_15 = arith.constant 0 : index
    %c0_16 = arith.constant 0 : index
    %19 = vector.load %arg7[%c0_15, %c0_16] : memref<1x128xf32, #tpu.memory_space<vmem>>, vector<1x128xf32>
    %20 = vector.broadcast %19 : vector<1x128xf32> to vector<300x128xf32>
    %21 = arith.addf %18, %20 : vector<300x128xf32>
    %cst_17 = arith.constant dense<0xFF800000> : vector<300xf32>
    %22 = vector.multi_reduction <maximumf>, %21, %cst_17 [1] : vector<300x128xf32> to vector<300xf32>
    %23 = vector.shape_cast %22 : vector<300xf32> to vector<300x1xf32>
    %24 = vector.broadcast %23 : vector<300x1xf32> to vector<300x128xf32>
    %25 = arith.subf %21, %24 : vector<300x128xf32>
    %26 = math.exp %25 : vector<300x128xf32>
    %cst_18 = arith.constant dense<0.000000e+00> : vector<300xf32>
    %27 = vector.multi_reduction <add>, %26, %cst_18 [1] : vector<300x128xf32> to vector<300xf32>
    %28 = vector.shape_cast %27 : vector<300xf32> to vector<300x1xf32>
    %29 = math.log %28 : vector<300x1xf32>
    %30 = vector.broadcast %29 : vector<300x1xf32> to vector<300x128xf32>
    %31 = arith.subf %25, %30 : vector<300x128xf32>
    %32 = arith.truncf %31 : vector<300x128xf32> to vector<300x128xbf16>
    %c0_19 = arith.constant 0 : index
    %c0_20 = arith.constant 0 : index
    %33 = vector.load %arg8[%c0_19, %c0_20] : memref<300x128xbf16, #tpu.memory_space<vmem>>, vector<300x128xbf16>
    tpu.vector_store %arg8[%c0_19, %c0_20], %32 {strides = array<i32>} : memref<300x128xbf16, #tpu.memory_space<vmem>>, vector<300x128xbf16>,
    return
  }
  func.func @transform_0(%arg0: i32) -> (i32, i32) {
    %c0_i32 = arith.constant 0 : i32
    %c0_i32_0 = arith.constant 0 : i32
    return %arg0, %c0_i32 : i32, i32
  }
  func.func @transform_1(%arg0: i32) -> (i32, i32) {
    %c0_i32 = arith.constant 0 : i32
    %c0_i32_0 = arith.constant 0 : i32
    %c0_i32_1 = arith.constant 0 : i32
    return %c0_i32, %c0_i32_0 : i32, i32
  }
  func.func @transform_2(%arg0: i32) -> (i32, i32) {
    %c0_i32 = arith.constant 0 : i32
    %c0_i32_0 = arith.constant 0 : i32
    %c0_i32_1 = arith.constant 0 : i32
    return %c0_i32, %c0_i32_0 : i32, i32
  }
  func.func @transform_3(%arg0: i32) -> (i32, i32) {
    %c0_i32 = arith.constant 0 : i32
    %c0_i32_0 = arith.constant 0 : i32
    %c0_i32_1 = arith.constant 0 : i32
    return %c0_i32, %c0_i32_0 : i32, i32
  }
  func.func @transform_4(%arg0: i32) -> (i32, i32) {
    %c0_i32 = arith.constant 0 : i32
    %c0_i32_0 = arith.constant 0 : i32
    %c0_i32_1 = arith.constant 0 : i32
    return %c0_i32, %c0_i32_0 : i32, i32
  }
  func.func @transform_5(%arg0: i32) -> (i32, i32) {
    %c0_i32 = arith.constant 0 : i32
    %c0_i32_0 = arith.constant 0 : i32
    %c0_i32_1 = arith.constant 0 : i32
    return %c0_i32, %c0_i32_0 : i32, i32
  }
  func.func @transform_6(%arg0: i32) -> (i32, i32) {
    %c0_i32 = arith.constant 0 : i32
    %c0_i32_0 = arith.constant 0 : i32
    %c0_i32_1 = arith.constant 0 : i32
    return %c0_i32, %c0_i32_0 : i32, i32
  }
  func.func @transform_7(%arg0: i32) -> (i32, i32) {
    %c0_i32 = arith.constant 0 : i32
    %c0_i32_0 = arith.constant 0 : i32
    return %arg0, %c0_i32 : i32, i32
  }
}

</mosaic_0001>

<llo_original>
// kernel: ffnn_forward.1
$region0: #{ffnn_forward.1}
  #allocation0 [shape = 'u32[]', space=smem, size = 0x4, offset = 0x4, fixed_abs, tag = 'smem constant byte address 0x4 - core index']
  #allocation1 [shape = 'u32[144,128]{1,0:T(1,128)}', space=vmem, size = 0x12000, scoped, tag = 'internal scratch']
  %s0 = inlined_call_operand.vmem [shape: bf16[300,256], index: 0, kind: input, shape index: {}]
  %s1 = inlined_call_operand.vmem [shape: bf16[256,128], index: 1, kind: input, shape index: {}]
  %s2 = inlined_call_operand.vmem [shape: f32[1,128], index: 2, kind: input, shape index: {}]
  %s3 = inlined_call_operand.vmem [shape: bf16[128,128], index: 3, kind: input, shape index: {}]
  %s4 = inlined_call_operand.vmem [shape: f32[1,128], index: 4, kind: input, shape index: {}]
  %s5 = inlined_call_operand.vmem [shape: bf16[128,128], index: 5, kind: input, shape index: {}]
  %s6 = inlined_call_operand.vmem [shape: f32[1,128], index: 6, kind: input, shape index: {}]
  %s7 = inlined_call_operand.vmem [shape: bf16[300,128], index: 7, kind: output, shape index: {}]
  %s8 = sld [smem:[#allocation0]]
  $region38: #{ffnn_forward.1} parent=0
    _
  %s10 = ssub.s32 1, %s8
  %s11 = scalar_select 0, %s10, %s8
  // Predicated region
  $region2: #{ffnn_forward.1} parent=0 // pred_check
    _
  $region3: #{ffnn_forward.1} parent=0 // pred_check_branch
    %13 = sbr.rel (0) target = $region5
  $region4: #{ffnn_forward.1} parent=0 // pred_region
    _
  $region5: #{ffnn_forward.1} parent=0 // pred_fallthru
    _
  // Predicated region
  $region6: #{ffnn_forward.1} parent=0 // pred_check
    _
  $region7: #{ffnn_forward.1} parent=0 // pred_check_branch
    %15 = sbr.rel (0) target = $region9
  $region8: #{ffnn_forward.1} parent=0 // pred_region
    _
  $region9: #{ffnn_forward.1} parent=0 // pred_fallthru
    _
  // Predicated region
  $region10: #{ffnn_forward.1} parent=0 // pred_check
    _
  $region11: #{ffnn_forward.1} parent=0 // pred_check_branch
    %17 = sbr.rel (0) target = $region13
  $region12: #{ffnn_forward.1} parent=0 // pred_region
    _
  $region13: #{ffnn_forward.1} parent=0 // pred_fallthru
    _
  // Predicated region
  $region14: #{ffnn_forward.1} parent=0 // pred_check
    _
  $region15: #{ffnn_forward.1} parent=0 // pred_check_branch
    %19 = sbr.rel (0) target = $region17
  $region16: #{ffnn_forward.1} parent=0 // pred_region
    _
  $region17: #{ffnn_forward.1} parent=0 // pred_fallthru
    _
  // Predicated region
  $region18: #{ffnn_forward.1} parent=0 // pred_check
    _
  $region19: #{ffnn_forward.1} parent=0 // pred_check_branch
    %21 = sbr.rel (0) target = $region21
  $region20: #{ffnn_forward.1} parent=0 // pred_region
    _
  $region21: #{ffnn_forward.1} parent=0 // pred_fallthru
    _
  // Predicated region
  $region22: #{ffnn_forward.1} parent=0 // pred_check
    _
  $region23: #{ffnn_forward.1} parent=0 // pred_check_branch
    %23 = sbr.rel (0) target = $region25
  $region24: #{ffnn_forward.1} parent=0 // pred_region
    _
  $region25: #{ffnn_forward.1} parent=0 // pred_fallthru
    _
  // Predicated region
  $region26: #{ffnn_forward.1} parent=0 // pred_check
    _
  $region27: #{ffnn_forward.1} parent=0 // pred_check_branch
    %25 = sbr.rel (0) target = $region29
  $region28: #{ffnn_forward.1} parent=0 // pred_region
    _
  $region29: #{ffnn_forward.1} parent=0 // pred_fallthru
    _
  %v27 = vld [vmem:[%s0] sm:$0xff]
  %v28 = vld [vmem:[%s0 + $0x8] sm:$0xff]
  %v29 = vld [vmem:[%s0 + $0x10] sm:$0xff]
  %v30 = vld [vmem:[%s0 + $0x18] sm:$0xff]
  %v31 = vld [vmem:[%s0 + $0x20] sm:$0xff]
  %v32 = vld [vmem:[%s0 + $0x28] sm:$0xff]
  %v33 = vld [vmem:[%s0 + $0x30] sm:$0xff]
  %v34 = vld [vmem:[%s0 + $0x38] sm:$0xff]
  %v35 = vld [vmem:[%s0 + $0x40] sm:$0xff]
  %v36 = vld [vmem:[%s0 + $0x48] sm:$0xff]
  %v37 = vld [vmem:[%s0 + $0x50] sm:$0xff]
  %v38 = vld [vmem:[%s0 + $0x58] sm:$0xff]
  %v39 = vld [vmem:[%s0 + $0x60] sm:$0xff]
  %v40 = vld [vmem:[%s0 + $0x68] sm:$0xff]
  %v41 = vld [vmem:[%s0 + $0x70] sm:$0xff]
  %v42 = vld [vmem:[%s0 + $0x78] sm:$0xff]
  %v43 = vld [vmem:[%s0 + $0x80] sm:$0xff]
  %v44 = vld [vmem:[%s0 + $0x88] sm:$0xff]
  %v45 = vld [vmem:[%s0 + $0x90] sm:$0xff]
  %v46 = vld [vmem:[%s0 + $0x98] sm:$0xff]
  %v47 = vld [vmem:[%s0 + $0xa0] sm:$0xff]
  %v48 = vld [vmem:[%s0 + $0xa8] sm:$0xff]
  %v49 = vld [vmem:[%s0 + $0xb0] sm:$0xff]
  %v50 = vld [vmem:[%s0 + $0xb8] sm:$0xff]
  %v51 = vld [vmem:[%s0 + $0xc0] sm:$0xff]
  %v52 = vld [vmem:[%s0 + $0xc8] sm:$0xff]
  %v53 = vld [vmem:[%s0 + $0xd0] sm:$0xff]
  %v54 = vld [vmem:[%s0 + $0xd8] sm:$0xff]
  %v55 = vld [vmem:[%s0 + $0xe0] sm:$0xff]
  %v56 = vld [vmem:[%s0 + $0xe8] sm:$0xff]
  %v57 = vld [vmem:[%s0 + $0xf0] sm:$0xff]
  %v58 = vld [vmem:[%s0 + $0xf8] sm:$0xff]
  %v59 = vld [vmem:[%s0 + $0x100] sm:$0xff]
  %v60 = vld [vmem:[%s0 + $0x108] sm:$0xff]
  %v61 = vld [vmem:[%s0 + $0x110] sm:$0xff]
  %v62 = vld [vmem:[%s0 + $0x118] sm:$0xff]
  %v63 = vld [vmem:[%s0 + $0x120] sm:$0xff]
  %v64 = vld [vmem:[%s0 + $0x128] sm:$0x33]
  %v65 = vld [vmem:[%s1] sm:$0xf]
  %v66 = vld [vmem:[%s1 + $0x4] sm:$0xf]
  %v67 = vld [vmem:[%s1 + $0x8] sm:$0xf]
  %v68 = vld [vmem:[%s1 + $0xc] sm:$0xf]
  %v69 = vld [vmem:[%s1 + $0x10] sm:$0xf]
  %v70 = vld [vmem:[%s1 + $0x14] sm:$0xf]
  %v71 = vld [vmem:[%s1 + $0x18] sm:$0xf]
  %v72 = vld [vmem:[%s1 + $0x1c] sm:$0xf]
  %v73 = vld [vmem:[%s1 + $0x20] sm:$0xf]
  %v74 = vld [vmem:[%s1 + $0x24] sm:$0xf]
  %v75 = vld [vmem:[%s1 + $0x28] sm:$0xf]
  %v76 = vld [vmem:[%s1 + $0x2c] sm:$0xf]
  %v77 = vld [vmem:[%s1 + $0x30] sm:$0xf]
  %v78 = vld [vmem:[%s1 + $0x34] sm:$0xf]
  %v79 = vld [vmem:[%s1 + $0x38] sm:$0xf]
  %v80 = vld [vmem:[%s1 + $0x3c] sm:$0xf]
  %v81 = vld [vmem:[%s1 + $0x40] sm:$0xf]
  %v82 = vld [vmem:[%s1 + $0x44] sm:$0xf]
  %v83 = vld [vmem:[%s1 + $0x48] sm:$0xf]
  %v84 = vld [vmem:[%s1 + $0x4c] sm:$0xf]
  %v85 = vld [vmem:[%s1 + $0x50] sm:$0xf]
  %v86 = vld [vmem:[%s1 + $0x54] sm:$0xf]
  %v87 = vld [vmem:[%s1 + $0x58] sm:$0xf]
  %v88 = vld [vmem:[%s1 + $0x5c] sm:$0xf]
  %v89 = vld [vmem:[%s1 + $0x60] sm:$0xf]
  %v90 = vld [vmem:[%s1 + $0x64] sm:$0xf]
  %v91 = vld [vmem:[%s1 + $0x68] sm:$0xf]
  %v92 = vld [vmem:[%s1 + $0x6c] sm:$0xf]
  %v93 = vld [vmem:[%s1 + $0x70] sm:$0xf]
  %v94 = vld [vmem:[%s1 + $0x74] sm:$0xf]
  %v95 = vld [vmem:[%s1 + $0x78] sm:$0xf]
  %v96 = vld [vmem:[%s1 + $0x7c] sm:$0xf]
  %v97 = vld [vmem:[%s2] sm:$0x1]
  %v99 = vlaneseq
  %v100 = vshrl.u32 %v99, 7
  %v101 = vsub.s32 0, %v100
  %v102 = vrot.slane %v97, %v101
  %v142 = vunpack.c.l.b16 %v27
  %v143 = vunpack.c.h.b16 %v27
  %v144 = vunpack.c.l.b16 %v28
  %v145 = vunpack.c.h.b16 %v28
  %v146 = vunpack.c.l.b16 %v29
  %v147 = vunpack.c.h.b16 %v29
  %v148 = vunpack.c.l.b16 %v30
  %v149 = vunpack.c.h.b16 %v30
  %v150 = vunpack.c.l.b16 %v31
  %v151 = vunpack.c.h.b16 %v31
  %v152 = vunpack.c.l.b16 %v32
  %v153 = vunpack.c.h.b16 %v32
  %v154 = vunpack.c.l.b16 %v33
  %v155 = vunpack.c.h.b16 %v33
  %v156 = vunpack.c.l.b16 %v34
  %v157 = vunpack.c.h.b16 %v34
  %v158 = vunpack.c.l.b16 %v35
  %v159 = vunpack.c.h.b16 %v35
  %v160 = vunpack.c.l.b16 %v36
  %v161 = vunpack.c.h.b16 %v36
  %v162 = vunpack.c.l.b16 %v37
  %v163 = vunpack.c.h.b16 %v37
  %v164 = vunpack.c.l.b16 %v38
  %v165 = vunpack.c.h.b16 %v38
  %v166 = vunpack.c.l.b16 %v39
  %v167 = vunpack.c.h.b16 %v39
  %v168 = vunpack.c.l.b16 %v40
  %v169 = vunpack.c.h.b16 %v40
  %v170 = vunpack.c.l.b16 %v41
  %v171 = vunpack.c.h.b16 %v41
  %v172 = vunpack.c.l.b16 %v42
  %v173 = vunpack.c.h.b16 %v42
  %v174 = vunpack.c.l.b16 %v43
  %v175 = vunpack.c.h.b16 %v43
  %v176 = vunpack.c.l.b16 %v44
  %v177 = vunpack.c.h.b16 %v44
  %v178 = vunpack.c.l.b16 %v45
  %v179 = vunpack.c.h.b16 %v45
  %v180 = vunpack.c.l.b16 %v46
  %v181 = vunpack.c.h.b16 %v46
  %v182 = vunpack.c.l.b16 %v47
  %v183 = vunpack.c.h.b16 %v47
  %v184 = vunpack.c.l.b16 %v48
  %v185 = vunpack.c.h.b16 %v48
  %v186 = vunpack.c.l.b16 %v49
  %v187 = vunpack.c.h.b16 %v49
  %v188 = vunpack.c.l.b16 %v50
  %v189 = vunpack.c.h.b16 %v50
  %v190 = vunpack.c.l.b16 %v51
  %v191 = vunpack.c.h.b16 %v51
  %v192 = vunpack.c.l.b16 %v52
  %v193 = vunpack.c.h.b16 %v52
  %v194 = vunpack.c.l.b16 %v53
  %v195 = vunpack.c.h.b16 %v53
  %v196 = vunpack.c.l.b16 %v54
  %v197 = vunpack.c.h.b16 %v54
  %v198 = vunpack.c.l.b16 %v55
  %v199 = vunpack.c.h.b16 %v55
  %v200 = vunpack.c.l.b16 %v56
  %v201 = vunpack.c.h.b16 %v56
  %v202 = vunpack.c.l.b16 %v57
  %v203 = vunpack.c.h.b16 %v57
  %v204 = vunpack.c.l.b16 %v58
  %v205 = vunpack.c.h.b16 %v58
  %v206 = vunpack.c.l.b16 %v59
  %v207 = vunpack.c.h.b16 %v59
  %v208 = vunpack.c.l.b16 %v60
  %v209 = vunpack.c.h.b16 %v60
  %v210 = vunpack.c.l.b16 %v61
  %v211 = vunpack.c.h.b16 %v61
  %v212 = vunpack.c.l.b16 %v62
  %v213 = vunpack.c.h.b16 %v62
  %v214 = vunpack.c.l.b16 %v63
  %v215 = vunpack.c.h.b16 %v63
  %v216 = vunpack.c.l.b16 %v64
  %v217 = vunpack.c.h.b16 %v64
  %v218 = vpack.c.b16 %v144, %v142
  %v219 = vpack.c.b16 %v145, %v143
  %v220 = vpack.c.b16 %v148, %v146
  %v221 = vpack.c.b16 %v149, %v147
  %v222 = vpack.c.b16 %v152, %v150
  %v223 = vpack.c.b16 %v153, %v151
  %v224 = vpack.c.b16 %v156, %v154
  %v225 = vpack.c.b16 %v157, %v155
  %v226 = vpack.c.b16 %v160, %v158
  %v227 = vpack.c.b16 %v161, %v159
  %v228 = vpack.c.b16 %v164, %v162
  %v229 = vpack.c.b16 %v165, %v163
  %v230 = vpack.c.b16 %v168, %v166
  %v231 = vpack.c.b16 %v169, %v167
  %v232 = vpack.c.b16 %v172, %v170
  %v233 = vpack.c.b16 %v173, %v171
  %v234 = vpack.c.b16 %v176, %v174
  %v235 = vpack.c.b16 %v177, %v175
  %v236 = vpack.c.b16 %v180, %v178
  %v237 = vpack.c.b16 %v181, %v179
  %v238 = vpack.c.b16 %v184, %v182
  %v239 = vpack.c.b16 %v185, %v183
  %v240 = vpack.c.b16 %v188, %v186
  %v241 = vpack.c.b16 %v189, %v187
  %v242 = vpack.c.b16 %v192, %v190
  %v243 = vpack.c.b16 %v193, %v191
  %v244 = vpack.c.b16 %v196, %v194
  %v245 = vpack.c.b16 %v197, %v195
  %v246 = vpack.c.b16 %v200, %v198
  %v247 = vpack.c.b16 %v201, %v199
  %v248 = vpack.c.b16 %v204, %v202
  %v249 = vpack.c.b16 %v205, %v203
  %v250 = vpack.c.b16 %v208, %v206
  %v251 = vpack.c.b16 %v209, %v207
  %v252 = vpack.c.b16 %v212, %v210
  %v253 = vpack.c.b16 %v213, %v211
  %v254 = vpack.c.b16 %v216, %v214
  %v255 = vpack.c.b16 %v217, %v215
  %v326 = vunpack.c.l.b16 %v65
  %v327 = vunpack.c.l.b16 %v66
  %v328 = vunpack.c.l.b16 %v67
  %v329 = vunpack.c.l.b16 %v68
  %v330 = vunpack.c.l.b16 %v69
  %v331 = vunpack.c.l.b16 %v70
  %v332 = vunpack.c.l.b16 %v71
  %v333 = vunpack.c.l.b16 %v72
  %v334 = vunpack.c.l.b16 %v73
  %v335 = vunpack.c.l.b16 %v74
  %v336 = vunpack.c.l.b16 %v75
  %v337 = vunpack.c.l.b16 %v76
  %v338 = vunpack.c.l.b16 %v77
  %v339 = vunpack.c.l.b16 %v78
  %v340 = vunpack.c.l.b16 %v79
  %v341 = vunpack.c.l.b16 %v80
  %v342 = vunpack.c.l.b16 %v81
  %v343 = vunpack.c.l.b16 %v82
  %v344 = vunpack.c.l.b16 %v83
  %v345 = vunpack.c.l.b16 %v84
  %v346 = vunpack.c.l.b16 %v85
  %v347 = vunpack.c.l.b16 %v86
  %v348 = vunpack.c.l.b16 %v87
  %v349 = vunpack.c.l.b16 %v88
  %v350 = vunpack.c.l.b16 %v89
  %v351 = vunpack.c.l.b16 %v90
  %v352 = vunpack.c.l.b16 %v91
  %v353 = vunpack.c.l.b16 %v92
  %v354 = vunpack.c.l.b16 %v93
  %v355 = vunpack.c.l.b16 %v94
  %v356 = vunpack.c.l.b16 %v95
  %v357 = vunpack.c.l.b16 %v96
  %v358 = vpack.c.b16 %v327, %v326
  %v359 = vpack.c.b16 %v329, %v328
  %v360 = vpack.c.b16 %v331, %v330
  %v361 = vpack.c.b16 %v333, %v332
  %v362 = vpack.c.b16 %v335, %v334
  %v363 = vpack.c.b16 %v337, %v336
  %v364 = vpack.c.b16 %v339, %v338
  %v365 = vpack.c.b16 %v341, %v340
  %v366 = vpack.c.b16 %v343, %v342
  %v367 = vpack.c.b16 %v345, %v344
  %v368 = vpack.c.b16 %v347, %v346
  %v369 = vpack.c.b16 %v349, %v348
  %v370 = vpack.c.b16 %v351, %v350
  %v371 = vpack.c.b16 %v353, %v352
  %v372 = vpack.c.b16 %v355, %v354
  %v373 = vpack.c.b16 %v357, %v356
  %390 = vmatprep.subr.bf16.mxu0 0
  %391 = vmatpush1.bf16.msra.mxu0 %v358
  %392 = vmatprep.subr.bf16.mxu0 0
  %393 = vmatpush1.bf16.msra.mxu0 %v359
  %394 = vmatprep.subr.bf16.mxu0 0
  %395 = vmatpush1.bf16.msra.mxu0 %v360
  %396 = vmatprep.subr.bf16.mxu0 0
  %397 = vmatpush1.bf16.msra.mxu0 %v361
  %398 = vmatprep.subr.bf16.mxu0 0
  %399 = vmatpush1.bf16.msra.mxu0 %v362
  %400 = vmatprep.subr.bf16.mxu0 0
  %401 = vmatpush1.bf16.msra.mxu0 %v363
  %402 = vmatprep.subr.bf16.mxu0 0
  %403 = vmatpush1.bf16.msra.mxu0 %v364
  %404 = vmatprep.subr.bf16.mxu0 0
  %405 = vmatpush1.bf16.msra.mxu0 %v365
  %406 = vmatprep.subr.bf16.mxu0 0
  %407 = vmatpush1.bf16.msra.mxu0 %v366
  %408 = vmatprep.subr.bf16.mxu0 0
  %409 = vmatpush1.bf16.msra.mxu0 %v367
  %410 = vmatprep.subr.bf16.mxu0 0
  %411 = vmatpush1.bf16.msra.mxu0 %v368
  %412 = vmatprep.subr.bf16.mxu0 0
  %413 = vmatpush1.bf16.msra.mxu0 %v369
  %414 = vmatprep.subr.bf16.mxu0 0
  %415 = vmatpush1.bf16.msra.mxu0 %v370
  %416 = vmatprep.subr.bf16.mxu0 0
  %417 = vmatpush1.bf16.msra.mxu0 %v371
  %418 = vmatprep.subr.bf16.mxu0 0
  %419 = vmatpush1.bf16.msra.mxu0 %v372
  %420 = vmatprep.subr.bf16.mxu0 0
  %421 = vmatpush1.bf16.msra.mxu0 %v373
  %422 = vmatprep.mubr.bf16.mxu0 %v219
  %423 = vmatmul.mubr.bf16.gmra.mrb[0].mxu0 %v218
  %v424 = vpop.f32.mrb[0].mxu0
  %v425 = vadd.f32 %v102, %v424
  %v426 = vpop.f32.mrb[0].mxu0
  %v427 = vpop.f32.mrb[0].mxu0
  %v428 = vadd.f32 %v102, %v427
  %v429 = vpop.f32.mrb[0].mxu0
  %430 = vmatprep.mubr.bf16.mxu0 %v221
  %431 = vmatmul.mubr.bf16.gmra.mrb[0].mxu0 %v220
  %v432 = vpop.f32.mrb[0].mxu0
  %v433 = vadd.f32 %v102, %v432
  %v434 = vpop.f32.mrb[0].mxu0
  %v435 = vpop.f32.mrb[0].mxu0
  %v436 = vadd.f32 %v102, %v435
  %v437 = vpop.f32.mrb[0].mxu0
  %438 = vmatprep.mubr.bf16.mxu0 %v223
  %439 = vmatmul.mubr.bf16.gmra.mrb[0].mxu0 %v222
  %v440 = vpop.f32.mrb[0].mxu0
  %v441 = vadd.f32 %v102, %v440
  %v442 = vpop.f32.mrb[0].mxu0
  %v443 = vpop.f32.mrb[0].mxu0
  %v444 = vadd.f32 %v102, %v443
  %v445 = vpop.f32.mrb[0].mxu0
  %446 = vmatprep.mubr.bf16.mxu0 %v225
  %447 = vmatmul.mubr.bf16.gmra.mrb[0].mxu0 %v224
  %v448 = vpop.f32.mrb[0].mxu0
  %v449 = vadd.f32 %v102, %v448
  %v450 = vpop.f32.mrb[0].mxu0
  %v451 = vpop.f32.mrb[0].mxu0
  %v452 = vadd.f32 %v102, %v451
  %v453 = vpop.f32.mrb[0].mxu0
  %454 = vmatprep.mubr.bf16.mxu0 %v227
  %455 = vmatmul.mubr.bf16.gmra.mrb[0].mxu0 %v226
  %v456 = vpop.f32.mrb[0].mxu0
  %v457 = vadd.f32 %v102, %v456
  %v458 = vpop.f32.mrb[0].mxu0
  %v459 = vpop.f32.mrb[0].mxu0
  %v460 = vadd.f32 %v102, %v459
  %v461 = vpop.f32.mrb[0].mxu0
  %462 = vmatprep.mubr.bf16.mxu0 %v229
  %463 = vmatmul.mubr.bf16.gmra.mrb[0].mxu0 %v228
  %v464 = vpop.f32.mrb[0].mxu0
  %v465 = vadd.f32 %v102, %v464
  %v466 = vpop.f32.mrb[0].mxu0
  %v467 = vpop.f32.mrb[0].mxu0
  %v468 = vadd.f32 %v102, %v467
  %v469 = vpop.f32.mrb[0].mxu0
  %470 = vmatprep.mubr.bf16.mxu0 %v231
  %471 = vmatmul.mubr.bf16.gmra.mrb[0].mxu0 %v230
  %v472 = vpop.f32.mrb[0].mxu0
  %v473 = vadd.f32 %v102, %v472
  %v474 = vpop.f32.mrb[0].mxu0
  %v475 = vpop.f32.mrb[0].mxu0
  %v476 = vadd.f32 %v102, %v475
  %v477 = vpop.f32.mrb[0].mxu0
  %478 = vmatprep.mubr.bf16.mxu0 %v233
  %479 = vmatmul.mubr.bf16.gmra.mrb[0].mxu0 %v232
  %v480 = vpop.f32.mrb[0].mxu0
  %v481 = vadd.f32 %v102, %v480
  %v482 = vpop.f32.mrb[0].mxu0
  %v483 = vpop.f32.mrb[0].mxu0
  %v484 = vadd.f32 %v102, %v483
  %v485 = vpop.f32.mrb[0].mxu0
  %486 = vmatprep.mubr.bf16.mxu0 %v235
  %487 = vmatmul.mubr.bf16.gmra.mrb[0].mxu0 %v234
  %v488 = vpop.f32.mrb[0].mxu0
  %v489 = vadd.f32 %v102, %v488
  %v490 = vpop.f32.mrb[0].mxu0
  %v491 = vpop.f32.mrb[0].mxu0
  %v492 = vadd.f32 %v102, %v491
  %v493 = vpop.f32.mrb[0].mxu0
  %494 = vmatprep.mubr.bf16.mxu0 %v237
  %495 = vmatmul.mubr.bf16.gmra.mrb[0].mxu0 %v236
  %v496 = vpop.f32.mrb[0].mxu0
  %v497 = vadd.f32 %v102, %v496
  %v498 = vpop.f32.mrb[0].mxu0
  %v499 = vpop.f32.mrb[0].mxu0
  %v500 = vadd.f32 %v102, %v499
  %v501 = vpop.f32.mrb[0].mxu0
  %502 = vmatprep.mubr.bf16.mxu0 %v239
  %503 = vmatmul.mubr.bf16.gmra.mrb[0].mxu0 %v238
  %v504 = vpop.f32.mrb[0].mxu0
  %v505 = vadd.f32 %v102, %v504
  %v506 = vpop.f32.mrb[0].mxu0
  %v507 = vpop.f32.mrb[0].mxu0
  %v508 = vadd.f32 %v102, %v507
  %v509 = vpop.f32.mrb[0].mxu0
  %510 = vmatprep.mubr.bf16.mxu0 %v241
  %511 = vmatmul.mubr.bf16.gmra.mrb[0].mxu0 %v240
  %v512 = vpop.f32.mrb[0].mxu0
  %v513 = vadd.f32 %v102, %v512
  %v514 = vpop.f32.mrb[0].mxu0
  %v515 = vpop.f32.mrb[0].mxu0
  %v516 = vadd.f32 %v102, %v515
  %v517 = vpop.f32.mrb[0].mxu0
  %518 = vmatprep.mubr.bf16.mxu0 %v243
  %519 = vmatmul.mubr.bf16.gmra.mrb[0].mxu0 %v242
  %v520 = vpop.f32.mrb[0].mxu0
  %v521 = vadd.f32 %v102, %v520
  %v522 = vpop.f32.mrb[0].mxu0
  %v523 = vpop.f32.mrb[0].mxu0
  %v524 = vadd.f32 %v102, %v523
  %v525 = vpop.f32.mrb[0].mxu0
  %526 = vmatprep.mubr.bf16.mxu0 %v245
  %527 = vmatmul.mubr.bf16.gmra.mrb[0].mxu0 %v244
  %v528 = vpop.f32.mrb[0].mxu0
  %v529 = vadd.f32 %v102, %v528
  %v530 = vpop.f32.mrb[0].mxu0
  %v531 = vpop.f32.mrb[0].mxu0
  %v532 = vadd.f32 %v102, %v531
  %v533 = vpop.f32.mrb[0].mxu0
  %534 = vmatprep.mubr.bf16.mxu0 %v247
  %535 = vmatmul.mubr.bf16.gmra.mrb[0].mxu0 %v246
  %v536 = vpop.f32.mrb[0].mxu0
  %v537 = vadd.f32 %v102, %v536
  %v538 = vpop.f32.mrb[0].mxu0
  %v539 = vpop.f32.mrb[0].mxu0
  %v540 = vadd.f32 %v102, %v539
  %v541 = vpop.f32.mrb[0].mxu0
  %542 = vmatprep.mubr.bf16.mxu0 %v249
  %543 = vmatmul.mubr.bf16.gmra.mrb[0].mxu0 %v248
  %v544 = vpop.f32.mrb[0].mxu0
  %v545 = vadd.f32 %v102, %v544
  %v546 = vpop.f32.mrb[0].mxu0
  %v547 = vpop.f32.mrb[0].mxu0
  %v548 = vadd.f32 %v102, %v547
  %v549 = vpop.f32.mrb[0].mxu0
  %550 = vmatprep.mubr.bf16.mxu0 %v251
  %551 = vmatmul.mubr.bf16.gmra.mrb[0].mxu0 %v250
  %v552 = vpop.f32.mrb[0].mxu0
  %v553 = vadd.f32 %v102, %v552
  %v554 = vpop.f32.mrb[0].mxu0
  %v555 = vpop.f32.mrb[0].mxu0
  %v556 = vadd.f32 %v102, %v555
  %v557 = vpop.f32.mrb[0].mxu0
  %558 = vmatprep.mubr.bf16.mxu0 %v253
  %559 = vmatmul.mubr.bf16.gmra.mrb[0].mxu0 %v252
  %v560 = vpop.f32.mrb[0].mxu0
  %v561 = vadd.f32 %v102, %v560
  %v562 = vpop.f32.mrb[0].mxu0
  %v563 = vpop.f32.mrb[0].mxu0
  %v564 = vadd.f32 %v102, %v563
  %v565 = vpop.f32.mrb[0].mxu0
  %566 = vmatprep.mubr.bf16.mxu0 %v255
  %567 = vmatmul.mubr.bf16.gmra.mrb[0].mxu0 %v254
  %v568 = vpop.f32.mrb[0].mxu0
  %v569 = vadd.f32 %v102, %v568
  %v570 = vpop.f32.mrb[0].mxu0
  %v571 = vpop.f32.mrb[0].mxu0
  %v572 = vadd.f32 %v102, %v571
  %v573 = vpop.f32.mrb[0].mxu0
  %574 = vdwg.mxu0
  %v575 = vmax.f32 %v425, 0.0
  %v576 = vmax.f32 %v428, 0.0
  %v577 = vmax.f32 %v433, 0.0
  %v578 = vmax.f32 %v436, 0.0
  %v579 = vmax.f32 %v441, 0.0
  %v580 = vmax.f32 %v444, 0.0
  %v581 = vmax.f32 %v449, 0.0
  %v582 = vmax.f32 %v452, 0.0
  %v583 = vmax.f32 %v457, 0.0
  %v584 = vmax.f32 %v460, 0.0
  %v585 = vmax.f32 %v465, 0.0
  %v586 = vmax.f32 %v468, 0.0
  %v587 = vmax.f32 %v473, 0.0
  %v588 = vmax.f32 %v476, 0.0
  %v589 = vmax.f32 %v481, 0.0
  %v590 = vmax.f32 %v484, 0.0
  %v591 = vmax.f32 %v489, 0.0
  %v592 = vmax.f32 %v492, 0.0
  %v593 = vmax.f32 %v497, 0.0
  %v594 = vmax.f32 %v500, 0.0
  %v595 = vmax.f32 %v505, 0.0
  %v596 = vmax.f32 %v508, 0.0
  %v597 = vmax.f32 %v513, 0.0
  %v598 = vmax.f32 %v516, 0.0
  %v599 = vmax.f32 %v521, 0.0
  %v600 = vmax.f32 %v524, 0.0
  %v601 = vmax.f32 %v529, 0.0
  %v602 = vmax.f32 %v532, 0.0
  %v603 = vmax.f32 %v537, 0.0
  %v604 = vmax.f32 %v540, 0.0
  %v605 = vmax.f32 %v545, 0.0
  %v606 = vmax.f32 %v548, 0.0
  %v607 = vmax.f32 %v553, 0.0
  %v608 = vmax.f32 %v556, 0.0
  %v609 = vmax.f32 %v561, 0.0
  %v610 = vmax.f32 %v564, 0.0
  %v611 = vmax.f32 %v569, 0.0
  %v612 = vmax.f32 %v572, 0.0
  %v613 = vpack.c.bf16 %v576, %v575
  %v614 = vpack.c.bf16 %v578, %v577
  %v615 = vpack.c.bf16 %v580, %v579
  %v616 = vpack.c.bf16 %v582, %v581
  %v617 = vpack.c.bf16 %v584, %v583
  %v618 = vpack.c.bf16 %v586, %v585
  %v619 = vpack.c.bf16 %v588, %v587
  %v620 = vpack.c.bf16 %v590, %v589
  %v621 = vpack.c.bf16 %v592, %v591
  %v622 = vpack.c.bf16 %v594, %v593
  %v623 = vpack.c.bf16 %v596, %v595
  %v624 = vpack.c.bf16 %v598, %v597
  %v625 = vpack.c.bf16 %v600, %v599
  %v626 = vpack.c.bf16 %v602, %v601
  %v627 = vpack.c.bf16 %v604, %v603
  %v628 = vpack.c.bf16 %v606, %v605
  %v629 = vpack.c.bf16 %v608, %v607
  %v630 = vpack.c.bf16 %v610, %v609
  %v631 = vpack.c.bf16 %v612, %v611
  %v632 = vld [vmem:[%s3] sm:$0xf]
  %v633 = vld [vmem:[%s3 + $0x4] sm:$0xf]
  %v634 = vld [vmem:[%s3 + $0x8] sm:$0xf]
  %v635 = vld [vmem:[%s3 + $0xc] sm:$0xf]
  %v636 = vld [vmem:[%s3 + $0x10] sm:$0xf]
  %v637 = vld [vmem:[%s3 + $0x14] sm:$0xf]
  %v638 = vld [vmem:[%s3 + $0x18] sm:$0xf]
  %v639 = vld [vmem:[%s3 + $0x1c] sm:$0xf]
  %v640 = vld [vmem:[%s3 + $0x20] sm:$0xf]
  %v641 = vld [vmem:[%s3 + $0x24] sm:$0xf]
  %v642 = vld [vmem:[%s3 + $0x28] sm:$0xf]
  %v643 = vld [vmem:[%s3 + $0x2c] sm:$0xf]
  %v644 = vld [vmem:[%s3 + $0x30] sm:$0xf]
  %v645 = vld [vmem:[%s3 + $0x34] sm:$0xf]
  %v646 = vld [vmem:[%s3 + $0x38] sm:$0xf]
  %v647 = vld [vmem:[%s3 + $0x3c] sm:$0xf]
  %v648 = vld [vmem:[%s4] sm:$0x1]
  %v650 = vlaneseq
  %v651 = vshrl.u32 %v650, 7
  %v652 = vsub.s32 0, %v651
  %v653 = vrot.slane %v648, %v652
  %v671 = vunpack.c.l.b16 %v632
  %v672 = vunpack.c.l.b16 %v633
  %v673 = vunpack.c.l.b16 %v634
  %v674 = vunpack.c.l.b16 %v635
  %v675 = vunpack.c.l.b16 %v636
  %v676 = vunpack.c.l.b16 %v637
  %v677 = vunpack.c.l.b16 %v638
  %v678 = vunpack.c.l.b16 %v639
  %v679 = vunpack.c.l.b16 %v640
  %v680 = vunpack.c.l.b16 %v641
  %v681 = vunpack.c.l.b16 %v642
  %v682 = vunpack.c.l.b16 %v643
  %v683 = vunpack.c.l.b16 %v644
  %v684 = vunpack.c.l.b16 %v645
  %v685 = vunpack.c.l.b16 %v646
  %v686 = vunpack.c.l.b16 %v647
  %v687 = vpack.c.b16 %v672, %v671
  %v688 = vpack.c.b16 %v674, %v673
  %v689 = vpack.c.b16 %v676, %v675
  %v690 = vpack.c.b16 %v678, %v677
  %v691 = vpack.c.b16 %v680, %v679
  %v692 = vpack.c.b16 %v682, %v681
  %v693 = vpack.c.b16 %v684, %v683
  %v694 = vpack.c.b16 %v686, %v685
  %703 = vmatprep.subr.bf16.mxu0 0
  %704 = vmatpush1.bf16.msra.mxu0 %v687
  %705 = vmatprep.subr.bf16.mxu0 0
  %706 = vmatpush1.bf16.msra.mxu0 %v688
  %707 = vmatprep.subr.bf16.mxu0 0
  %708 = vmatpush1.bf16.msra.mxu0 %v689
  %709 = vmatprep.subr.bf16.mxu0 0
  %710 = vmatpush1.bf16.msra.mxu0 %v690
  %711 = vmatprep.subr.bf16.mxu0 0
  %712 = vmatpush1.bf16.msra.mxu0 %v691
  %713 = vmatprep.subr.bf16.mxu0 0
  %714 = vmatpush1.bf16.msra.mxu0 %v692
  %715 = vmatprep.subr.bf16.mxu0 0
  %716 = vmatpush1.bf16.msra.mxu0 %v693
  %717 = vmatprep.subr.bf16.mxu0 0
  %718 = vmatpush1.bf16.msra.mxu0 %v694
  %719 = vmatprep.subr.bf16.mxu0 0
  %720 = vmatpush1.bf16.msra.mxu0 0
  %721 = vmatprep.subr.bf16.mxu0 0
  %722 = vmatpush1.bf16.msra.mxu0 0
  %723 = vmatprep.subr.bf16.mxu0 0
  %724 = vmatpush1.bf16.msra.mxu0 0
  %725 = vmatprep.subr.bf16.mxu0 0
  %726 = vmatpush1.bf16.msra.mxu0 0
  %727 = vmatprep.subr.bf16.mxu0 0
  %728 = vmatpush1.bf16.msra.mxu0 0
  %729 = vmatprep.subr.bf16.mxu0 0
  %730 = vmatpush1.bf16.msra.mxu0 0
  %731 = vmatprep.subr.bf16.mxu0 0
  %732 = vmatpush1.bf16.msra.mxu0 0
  %733 = vmatprep.subr.bf16.mxu0 0
  %734 = vmatpush1.bf16.msra.mxu0 0
  %735 = vmatprep.mubr.bf16.mxu0 0
  %736 = vmatmul.mubr.bf16.gmra.mrb[0].mxu0 %v613
  %v737 = vpop.f32.mrb[0].mxu0
  %v738 = vadd.f32 %v653, %v737
  %v739 = vpop.f32.mrb[0].mxu0
  %v740 = vpop.f32.mrb[0].mxu0
  %v741 = vadd.f32 %v653, %v740
  %v742 = vpop.f32.mrb[0].mxu0
  %743 = vmatprep.mubr.bf16.mxu0 0
  %744 = vmatmul.mubr.bf16.gmra.mrb[0].mxu0 %v614
  %v745 = vpop.f32.mrb[0].mxu0
  %v746 = vadd.f32 %v653, %v745
  %v747 = vpop.f32.mrb[0].mxu0
  %v748 = vpop.f32.mrb[0].mxu0
  %v749 = vadd.f32 %v653, %v748
  %v750 = vpop.f32.mrb[0].mxu0
  %751 = vmatprep.mubr.bf16.mxu0 0
  %752 = vmatmul.mubr.bf16.gmra.mrb[0].mxu0 %v615
  %v753 = vpop.f32.mrb[0].mxu0
  %v754 = vadd.f32 %v653, %v753
  %v755 = vpop.f32.mrb[0].mxu0
  %v756 = vpop.f32.mrb[0].mxu0
  %v757 = vadd.f32 %v653, %v756
  %v758 = vpop.f32.mrb[0].mxu0
  %759 = vmatprep.mubr.bf16.mxu0 0
  %760 = vmatmul.mubr.bf16.gmra.mrb[0].mxu0 %v616
  %v761 = vpop.f32.mrb[0].mxu0
  %v762 = vadd.f32 %v653, %v761
  %v763 = vpop.f32.mrb[0].mxu0
  %v764 = vpop.f32.mrb[0].mxu0
  %v765 = vadd.f32 %v653, %v764
  %v766 = vpop.f32.mrb[0].mxu0
  %767 = vmatprep.mubr.bf16.mxu0 0
  %768 = vmatmul.mubr.bf16.gmra.mrb[0].mxu0 %v617
  %v769 = vpop.f32.mrb[0].mxu0
  %v770 = vadd.f32 %v653, %v769
  %v771 = vpop.f32.mrb[0].mxu0
  %v772 = vpop.f32.mrb[0].mxu0
  %v773 = vadd.f32 %v653, %v772
  %v774 = vpop.f32.mrb[0].mxu0
  %775 = vmatprep.mubr.bf16.mxu0 0
  %776 = vmatmul.mubr.bf16.gmra.mrb[0].mxu0 %v618
  %v777 = vpop.f32.mrb[0].mxu0
  %v778 = vadd.f32 %v653, %v777
  %v779 = vpop.f32.mrb[0].mxu0
  %v780 = vpop.f32.mrb[0].mxu0
  %v781 = vadd.f32 %v653, %v780
  %v782 = vpop.f32.mrb[0].mxu0
  %783 = vmatprep.mubr.bf16.mxu0 0
  %784 = vmatmul.mubr.bf16.gmra.mrb[0].mxu0 %v619
  %v785 = vpop.f32.mrb[0].mxu0
  %v786 = vadd.f32 %v653, %v785
  %v787 = vpop.f32.mrb[0].mxu0
  %v788 = vpop.f32.mrb[0].mxu0
  %v789 = vadd.f32 %v653, %v788
  %v790 = vpop.f32.mrb[0].mxu0
  %791 = vmatprep.mubr.bf16.mxu0 0
  %792 = vmatmul.mubr.bf16.gmra.mrb[0].mxu0 %v620
  %v793 = vpop.f32.mrb[0].mxu0
  %v794 = vadd.f32 %v653, %v793
  %v795 = vpop.f32.mrb[0].mxu0
  %v796 = vpop.f32.mrb[0].mxu0
  %v797 = vadd.f32 %v653, %v796
  %v798 = vpop.f32.mrb[0].mxu0
  %799 = vmatprep.mubr.bf16.mxu0 0
  %800 = vmatmul.mubr.bf16.gmra.mrb[0].mxu0 %v621
  %v801 = vpop.f32.mrb[0].mxu0
  %v802 = vadd.f32 %v653, %v801
  %v803 = vpop.f32.mrb[0].mxu0
  %v804 = vpop.f32.mrb[0].mxu0
  %v805 = vadd.f32 %v653, %v804
  %v806 = vpop.f32.mrb[0].mxu0
  %807 = vmatprep.mubr.bf16.mxu0 0
  %808 = vmatmul.mubr.bf16.gmra.mrb[0].mxu0 %v622
  %v809 = vpop.f32.mrb[0].mxu0
  %v810 = vadd.f32 %v653, %v809
  %v811 = vpop.f32.mrb[0].mxu0
  %v812 = vpop.f32.mrb[0].mxu0
  %v813 = vadd.f32 %v653, %v812
  %v814 = vpop.f32.mrb[0].mxu0
  %815 = vmatprep.mubr.bf16.mxu0 0
  %816 = vmatmul.mubr.bf16.gmra.mrb[0].mxu0 %v623
  %v817 = vpop.f32.mrb[0].mxu0
  %v818 = vadd.f32 %v653, %v817
  %v819 = vpop.f32.mrb[0].mxu0
  %v820 = vpop.f32.mrb[0].mxu0
  %v821 = vadd.f32 %v653, %v820
  %v822 = vpop.f32.mrb[0].mxu0
  %823 = vmatprep.mubr.bf16.mxu0 0
  %824 = vmatmul.mubr.bf16.gmra.mrb[0].mxu0 %v624
  %v825 = vpop.f32.mrb[0].mxu0
  %v826 = vadd.f32 %v653, %v825
  %v827 = vpop.f32.mrb[0].mxu0
  %v828 = vpop.f32.mrb[0].mxu0
  %v829 = vadd.f32 %v653, %v828
  %v830 = vpop.f32.mrb[0].mxu0
  %831 = vmatprep.mubr.bf16.mxu0 0
  %832 = vmatmul.mubr.bf16.gmra.mrb[0].mxu0 %v625
  %v833 = vpop.f32.mrb[0].mxu0
  %v834 = vadd.f32 %v653, %v833
  %v835 = vpop.f32.mrb[0].mxu0
  %v836 = vpop.f32.mrb[0].mxu0
  %v837 = vadd.f32 %v653, %v836
  %v838 = vpop.f32.mrb[0].mxu0
  %839 = vmatprep.mubr.bf16.mxu0 0
  %840 = vmatmul.mubr.bf16.gmra.mrb[0].mxu0 %v626
  %v841 = vpop.f32.mrb[0].mxu0
  %v842 = vadd.f32 %v653, %v841
  %v843 = vpop.f32.mrb[0].mxu0
  %v844 = vpop.f32.mrb[0].mxu0
  %v845 = vadd.f32 %v653, %v844
  %v846 = vpop.f32.mrb[0].mxu0
  %847 = vmatprep.mubr.bf16.mxu0 0
  %848 = vmatmul.mubr.bf16.gmra.mrb[0].mxu0 %v627
  %v849 = vpop.f32.mrb[0].mxu0
  %v850 = vadd.f32 %v653, %v849
  %v851 = vpop.f32.mrb[0].mxu0
  %v852 = vpop.f32.mrb[0].mxu0
  %v853 = vadd.f32 %v653, %v852
  %v854 = vpop.f32.mrb[0].mxu0
  %855 = vmatprep.mubr.bf16.mxu0 0
  %856 = vmatmul.mubr.bf16.gmra.mrb[0].mxu0 %v628
  %v857 = vpop.f32.mrb[0].mxu0
  %v858 = vadd.f32 %v653, %v857
  %v859 = vpop.f32.mrb[0].mxu0
  %v860 = vpop.f32.mrb[0].mxu0
  %v861 = vadd.f32 %v653, %v860
  %v862 = vpop.f32.mrb[0].mxu0
  %863 = vmatprep.mubr.bf16.mxu0 0
  %864 = vmatmul.mubr.bf16.gmra.mrb[0].mxu0 %v629
  %v865 = vpop.f32.mrb[0].mxu0
  %v866 = vadd.f32 %v653, %v865
  %v867 = vpop.f32.mrb[0].mxu0
  %v868 = vpop.f32.mrb[0].mxu0
  %v869 = vadd.f32 %v653, %v868
  %v870 = vpop.f32.mrb[0].mxu0
  %871 = vmatprep.mubr.bf16.mxu0 0
  %872 = vmatmul.mubr.bf16.gmra.mrb[0].mxu0 %v630
  %v873 = vpop.f32.mrb[0].mxu0
  %v874 = vadd.f32 %v653, %v873
  %v875 = vpop.f32.mrb[0].mxu0
  %v876 = vpop.f32.mrb[0].mxu0
  %v877 = vadd.f32 %v653, %v876
  %v878 = vpop.f32.mrb[0].mxu0
  %879 = vmatprep.mubr.bf16.mxu0 0
  %880 = vmatmul.mubr.bf16.gmra.mrb[0].mxu0 %v631
  %v881 = vpop.f32.mrb[0].mxu0
  %v882 = vadd.f32 %v653, %v881
  %v883 = vpop.f32.mrb[0].mxu0
  %v884 = vpop.f32.mrb[0].mxu0
  %v885 = vadd.f32 %v653, %v884
  %v886 = vpop.f32.mrb[0].mxu0
  %887 = vdwg.mxu0
  %v888 = vmax.f32 %v738, 0.0
  %v889 = vmax.f32 %v741, 0.0
  %v890 = vmax.f32 %v746, 0.0
  %v891 = vmax.f32 %v749, 0.0
  %v892 = vmax.f32 %v754, 0.0
  %v893 = vmax.f32 %v757, 0.0
  %v894 = vmax.f32 %v762, 0.0
  %v895 = vmax.f32 %v765, 0.0
  %v896 = vmax.f32 %v770, 0.0
  %v897 = vmax.f32 %v773, 0.0
  %v898 = vmax.f32 %v778, 0.0
  %v899 = vmax.f32 %v781, 0.0
  %v900 = vmax.f32 %v786, 0.0
  %v901 = vmax.f32 %v789, 0.0
  %v902 = vmax.f32 %v794, 0.0
  %v903 = vmax.f32 %v797, 0.0
  %v904 = vmax.f32 %v802, 0.0
  %v905 = vmax.f32 %v805, 0.0
  %v906 = vmax.f32 %v810, 0.0
  %v907 = vmax.f32 %v813, 0.0
  %v908 = vmax.f32 %v818, 0.0
  %v909 = vmax.f32 %v821, 0.0
  %v910 = vmax.f32 %v826, 0.0
  %v911 = vmax.f32 %v829, 0.0
  %v912 = vmax.f32 %v834, 0.0
  %v913 = vmax.f32 %v837, 0.0
  %v914 = vmax.f32 %v842, 0.0
  %v915 = vmax.f32 %v845, 0.0
  %v916 = vmax.f32 %v850, 0.0
  %v917 = vmax.f32 %v853, 0.0
  %v918 = vmax.f32 %v858, 0.0
  %v919 = vmax.f32 %v861, 0.0
  %v920 = vmax.f32 %v866, 0.0
  %v921 = vmax.f32 %v869, 0.0
  %v922 = vmax.f32 %v874, 0.0
  %v923 = vmax.f32 %v877, 0.0
  %v924 = vmax.f32 %v882, 0.0
  %v925 = vmax.f32 %v885, 0.0
  %v926 = vpack.c.bf16 %v889, %v888
  %v927 = vpack.c.bf16 %v891, %v890
  %v928 = vpack.c.bf16 %v893, %v892
  %v929 = vpack.c.bf16 %v895, %v894
  %v930 = vpack.c.bf16 %v897, %v896
  %v931 = vpack.c.bf16 %v899, %v898
  %v932 = vpack.c.bf16 %v901, %v900
  %v933 = vpack.c.bf16 %v903, %v902
  %v934 = vpack.c.bf16 %v905, %v904
  %v935 = vpack.c.bf16 %v907, %v906
  %v936 = vpack.c.bf16 %v909, %v908
  %v937 = vpack.c.bf16 %v911, %v910
  %v938 = vpack.c.bf16 %v913, %v912
  %v939 = vpack.c.bf16 %v915, %v914
  %v940 = vpack.c.bf16 %v917, %v916
  %v941 = vpack.c.bf16 %v919, %v918
  %v942 = vpack.c.bf16 %v921, %v920
  %v943 = vpack.c.bf16 %v923, %v922
  %v944 = vpack.c.bf16 %v925, %v924
  %v945 = vld [vmem:[%s5] sm:$0xf]
  %v946 = vld [vmem:[%s5 + $0x4] sm:$0xf]
  %v947 = vld [vmem:[%s5 + $0x8] sm:$0xf]
  %v948 = vld [vmem:[%s5 + $0xc] sm:$0xf]
  %v949 = vld [vmem:[%s5 + $0x10] sm:$0xf]
  %v950 = vld [vmem:[%s5 + $0x14] sm:$0xf]
  %v951 = vld [vmem:[%s5 + $0x18] sm:$0xf]
  %v952 = vld [vmem:[%s5 + $0x1c] sm:$0xf]
  %v953 = vld [vmem:[%s5 + $0x20] sm:$0xf]
  %v954 = vld [vmem:[%s5 + $0x24] sm:$0xf]
  %v955 = vld [vmem:[%s5 + $0x28] sm:$0xf]
  %v956 = vld [vmem:[%s5 + $0x2c] sm:$0xf]
  %v957 = vld [vmem:[%s5 + $0x30] sm:$0xf]
  %v958 = vld [vmem:[%s5 + $0x34] sm:$0xf]
  %v959 = vld [vmem:[%s5 + $0x38] sm:$0xf]
  %v960 = vld [vmem:[%s5 + $0x3c] sm:$0xf]
  %v961 = vld [vmem:[%s6] sm:$0x1]
  %v963 = vlaneseq
  %v964 = vshrl.u32 %v963, 7
  %v965 = vsub.s32 0, %v964
  %v966 = vrot.slane %v961, %v965
  %v984 = vunpack.c.l.b16 %v945
  %v985 = vunpack.c.l.b16 %v946
  %v986 = vunpack.c.l.b16 %v947
  %v987 = vunpack.c.l.b16 %v948
  %v988 = vunpack.c.l.b16 %v949
  %v989 = vunpack.c.l.b16 %v950
  %v990 = vunpack.c.l.b16 %v951
  %v991 = vunpack.c.l.b16 %v952
  %v992 = vunpack.c.l.b16 %v953
  %v993 = vunpack.c.l.b16 %v954
  %v994 = vunpack.c.l.b16 %v955
  %v995 = vunpack.c.l.b16 %v956
  %v996 = vunpack.c.l.b16 %v957
  %v997 = vunpack.c.l.b16 %v958
  %v998 = vunpack.c.l.b16 %v959
  %v999 = vunpack.c.l.b16 %v960
  %v1000 = vpack.c.b16 %v985, %v984
  %v1001 = vpack.c.b16 %v987, %v986
  %v1002 = vpack.c.b16 %v989, %v988
  %v1003 = vpack.c.b16 %v991, %v990
  %v1004 = vpack.c.b16 %v993, %v992
  %v1005 = vpack.c.b16 %v995, %v994
  %v1006 = vpack.c.b16 %v997, %v996
  %v1007 = vpack.c.b16 %v999, %v998
  %1016 = vmatprep.subr.bf16.mxu0 0
  %1017 = vmatpush1.bf16.msra.mxu0 %v1000
  %1018 = vmatprep.subr.bf16.mxu0 0
  %1019 = vmatpush1.bf16.msra.mxu0 %v1001
  %1020 = vmatprep.subr.bf16.mxu0 0
  %1021 = vmatpush1.bf16.msra.mxu0 %v1002
  %1022 = vmatprep.subr.bf16.mxu0 0
  %1023 = vmatpush1.bf16.msra.mxu0 %v1003
  %1024 = vmatprep.subr.bf16.mxu0 0
  %1025 = vmatpush1.bf16.msra.mxu0 %v1004
  %1026 = vmatprep.subr.bf16.mxu0 0
  %1027 = vmatpush1.bf16.msra.mxu0 %v1005
  %1028 = vmatprep.subr.bf16.mxu0 0
  %1029 = vmatpush1.bf16.msra.mxu0 %v1006
  %1030 = vmatprep.subr.bf16.mxu0 0
  %1031 = vmatpush1.bf16.msra.mxu0 %v1007
  %1032 = vmatprep.subr.bf16.mxu0 0
  %1033 = vmatpush1.bf16.msra.mxu0 0
  %1034 = vmatprep.subr.bf16.mxu0 0
  %1035 = vmatpush1.bf16.msra.mxu0 0
  %1036 = vmatprep.subr.bf16.mxu0 0
  %1037 = vmatpush1.bf16.msra.mxu0 0
  %1038 = vmatprep.subr.bf16.mxu0 0
  %1039 = vmatpush1.bf16.msra.mxu0 0
  %1040 = vmatprep.subr.bf16.mxu0 0
  %1041 = vmatpush1.bf16.msra.mxu0 0
  %1042 = vmatprep.subr.bf16.mxu0 0
  %1043 = vmatpush1.bf16.msra.mxu0 0
  %1044 = vmatprep.subr.bf16.mxu0 0
  %1045 = vmatpush1.bf16.msra.mxu0 0
  %1046 = vmatprep.subr.bf16.mxu0 0
  %1047 = vmatpush1.bf16.msra.mxu0 0
  %1048 = vmatprep.mubr.bf16.mxu0 0
  %1049 = vmatmul.mubr.bf16.gmra.mrb[0].mxu0 %v926
  %v1050 = vpop.f32.mrb[0].mxu0
  %v1051 = vadd.f32 %v966, %v1050
  %v1052 = vpop.f32.mrb[0].mxu0
  %v1053 = vpop.f32.mrb[0].mxu0
  %v1054 = vadd.f32 %v966, %v1053
  %v1055 = vpop.f32.mrb[0].mxu0
  %1056 = vmatprep.mubr.bf16.mxu0 0
  %1057 = vmatmul.mubr.bf16.gmra.mrb[0].mxu0 %v927
  %v1058 = vpop.f32.mrb[0].mxu0
  %v1059 = vadd.f32 %v966, %v1058
  %v1060 = vpop.f32.mrb[0].mxu0
  %v1061 = vpop.f32.mrb[0].mxu0
  %v1062 = vadd.f32 %v966, %v1061
  %v1063 = vpop.f32.mrb[0].mxu0
  %1064 = vmatprep.mubr.bf16.mxu0 0
  %1065 = vmatmul.mubr.bf16.gmra.mrb[0].mxu0 %v928
  %v1066 = vpop.f32.mrb[0].mxu0
  %v1067 = vadd.f32 %v966, %v1066
  %v1068 = vpop.f32.mrb[0].mxu0
  %v1069 = vpop.f32.mrb[0].mxu0
  %v1070 = vadd.f32 %v966, %v1069
  %v1071 = vpop.f32.mrb[0].mxu0
  %1072 = vmatprep.mubr.bf16.mxu0 0
  %1073 = vmatmul.mubr.bf16.gmra.mrb[0].mxu0 %v929
  %v1074 = vpop.f32.mrb[0].mxu0
  %v1075 = vadd.f32 %v966, %v1074
  %v1076 = vpop.f32.mrb[0].mxu0
  %v1077 = vpop.f32.mrb[0].mxu0
  %v1078 = vadd.f32 %v966, %v1077
  %v1079 = vpop.f32.mrb[0].mxu0
  %1080 = vmatprep.mubr.bf16.mxu0 0
  %1081 = vmatmul.mubr.bf16.gmra.mrb[0].mxu0 %v930
  %v1082 = vpop.f32.mrb[0].mxu0
  %v1083 = vadd.f32 %v966, %v1082
  %v1084 = vpop.f32.mrb[0].mxu0
  %v1085 = vpop.f32.mrb[0].mxu0
  %v1086 = vadd.f32 %v966, %v1085
  %v1087 = vpop.f32.mrb[0].mxu0
  %1088 = vmatprep.mubr.bf16.mxu0 0
  %1089 = vmatmul.mubr.bf16.gmra.mrb[0].mxu0 %v931
  %v1090 = vpop.f32.mrb[0].mxu0
  %v1091 = vadd.f32 %v966, %v1090
  %v1092 = vpop.f32.mrb[0].mxu0
  %v1093 = vpop.f32.mrb[0].mxu0
  %v1094 = vadd.f32 %v966, %v1093
  %v1095 = vpop.f32.mrb[0].mxu0
  %1096 = vmatprep.mubr.bf16.mxu0 0
  %1097 = vmatmul.mubr.bf16.gmra.mrb[0].mxu0 %v932
  %v1098 = vpop.f32.mrb[0].mxu0
  %v1099 = vadd.f32 %v966, %v1098
  %v1100 = vpop.f32.mrb[0].mxu0
  %v1101 = vpop.f32.mrb[0].mxu0
  %v1102 = vadd.f32 %v966, %v1101
  %v1103 = vpop.f32.mrb[0].mxu0
  %1104 = vmatprep.mubr.bf16.mxu0 0
  %1105 = vmatmul.mubr.bf16.gmra.mrb[0].mxu0 %v933
  %v1106 = vpop.f32.mrb[0].mxu0
  %v1107 = vadd.f32 %v966, %v1106
  %v1108 = vpop.f32.mrb[0].mxu0
  %v1109 = vpop.f32.mrb[0].mxu0
  %v1110 = vadd.f32 %v966, %v1109
  %v1111 = vpop.f32.mrb[0].mxu0
  %1112 = vmatprep.mubr.bf16.mxu0 0
  %1113 = vmatmul.mubr.bf16.gmra.mrb[0].mxu0 %v934
  %v1114 = vpop.f32.mrb[0].mxu0
  %v1115 = vadd.f32 %v966, %v1114
  %v1116 = vpop.f32.mrb[0].mxu0
  %v1117 = vpop.f32.mrb[0].mxu0
  %v1118 = vadd.f32 %v966, %v1117
  %v1119 = vpop.f32.mrb[0].mxu0
  %1120 = vmatprep.mubr.bf16.mxu0 0
  %1121 = vmatmul.mubr.bf16.gmra.mrb[0].mxu0 %v935
  %v1122 = vpop.f32.mrb[0].mxu0
  %v1123 = vadd.f32 %v966, %v1122
  %v1124 = vpop.f32.mrb[0].mxu0
  %v1125 = vpop.f32.mrb[0].mxu0
  %v1126 = vadd.f32 %v966, %v1125
  %v1127 = vpop.f32.mrb[0].mxu0
  %1128 = vmatprep.mubr.bf16.mxu0 0
  %1129 = vmatmul.mubr.bf16.gmra.mrb[0].mxu0 %v936
  %v1130 = vpop.f32.mrb[0].mxu0
  %v1131 = vadd.f32 %v966, %v1130
  %v1132 = vpop.f32.mrb[0].mxu0
  %v1133 = vpop.f32.mrb[0].mxu0
  %v1134 = vadd.f32 %v966, %v1133
  %v1135 = vpop.f32.mrb[0].mxu0
  %1136 = vmatprep.mubr.bf16.mxu0 0
  %1137 = vmatmul.mubr.bf16.gmra.mrb[0].mxu0 %v937
  %v1138 = vpop.f32.mrb[0].mxu0
  %v1139 = vadd.f32 %v966, %v1138
  %v1140 = vpop.f32.mrb[0].mxu0
  %v1141 = vpop.f32.mrb[0].mxu0
  %v1142 = vadd.f32 %v966, %v1141
  %v1143 = vpop.f32.mrb[0].mxu0
  %1144 = vmatprep.mubr.bf16.mxu0 0
  %1145 = vmatmul.mubr.bf16.gmra.mrb[0].mxu0 %v938
  %v1146 = vpop.f32.mrb[0].mxu0
  %v1147 = vadd.f32 %v966, %v1146
  %v1148 = vpop.f32.mrb[0].mxu0
  %v1149 = vpop.f32.mrb[0].mxu0
  %v1150 = vadd.f32 %v966, %v1149
  %v1151 = vpop.f32.mrb[0].mxu0
  %1152 = vmatprep.mubr.bf16.mxu0 0
  %1153 = vmatmul.mubr.bf16.gmra.mrb[0].mxu0 %v939
  %v1154 = vpop.f32.mrb[0].mxu0
  %v1155 = vadd.f32 %v966, %v1154
  %v1156 = vpop.f32.mrb[0].mxu0
  %v1157 = vpop.f32.mrb[0].mxu0
  %v1158 = vadd.f32 %v966, %v1157
  %v1159 = vpop.f32.mrb[0].mxu0
  %1160 = vmatprep.mubr.bf16.mxu0 0
  %1161 = vmatmul.mubr.bf16.gmra.mrb[0].mxu0 %v940
  %v1162 = vpop.f32.mrb[0].mxu0
  %v1163 = vadd.f32 %v966, %v1162
  %v1164 = vpop.f32.mrb[0].mxu0
  %v1165 = vpop.f32.mrb[0].mxu0
  %v1166 = vadd.f32 %v966, %v1165
  %v1167 = vpop.f32.mrb[0].mxu0
  %1168 = vmatprep.mubr.bf16.mxu0 0
  %1169 = vmatmul.mubr.bf16.gmra.mrb[0].mxu0 %v941
  %v1170 = vpop.f32.mrb[0].mxu0
  %v1171 = vadd.f32 %v966, %v1170
  %v1172 = vpop.f32.mrb[0].mxu0
  %v1173 = vpop.f32.mrb[0].mxu0
  %v1174 = vadd.f32 %v966, %v1173
  %v1175 = vpop.f32.mrb[0].mxu0
  %1176 = vmatprep.mubr.bf16.mxu0 0
  %1177 = vmatmul.mubr.bf16.gmra.mrb[0].mxu0 %v942
  %v1178 = vpop.f32.mrb[0].mxu0
  %v1179 = vadd.f32 %v966, %v1178
  %v1180 = vpop.f32.mrb[0].mxu0
  %v1181 = vpop.f32.mrb[0].mxu0
  %v1182 = vadd.f32 %v966, %v1181
  %v1183 = vpop.f32.mrb[0].mxu0
  %1184 = vmatprep.mubr.bf16.mxu0 0
  %1185 = vmatmul.mubr.bf16.gmra.mrb[0].mxu0 %v943
  %v1186 = vpop.f32.mrb[0].mxu0
  %v1187 = vadd.f32 %v966, %v1186
  %v1188 = vpop.f32.mrb[0].mxu0
  %v1189 = vpop.f32.mrb[0].mxu0
  %v1190 = vadd.f32 %v966, %v1189
  %v1191 = vpop.f32.mrb[0].mxu0
  %1192 = vmatprep.mubr.bf16.mxu0 0
  %1193 = vmatmul.mubr.bf16.gmra.mrb[0].mxu0 %v944
  %v1194 = vpop.f32.mrb[0].mxu0
  %v1195 = vadd.f32 %v966, %v1194
  %v1196 = vpop.f32.mrb[0].mxu0
  %v1197 = vpop.f32.mrb[0].mxu0
  %v1198 = vadd.f32 %v966, %v1197
  %v1199 = vpop.f32.mrb[0].mxu0
  %1200 = vdwg.mxu0
  %1201 = vmax.xlane.f32.xlu0 %v1051
  %v1202 = vpop.xlane.xlu0 %1201
  %1203 = vmax.xlane.f32.xlu0 %v1054
  %v1204 = vpop.xlane.xlu0 %1203
  %1205 = vmax.xlane.f32.xlu0 %v1059
  %v1206 = vpop.xlane.xlu0 %1205
  %1207 = vmax.xlane.f32.xlu0 %v1062
  %v1208 = vpop.xlane.xlu0 %1207
  %1209 = vmax.xlane.f32.xlu0 %v1067
  %v1210 = vpop.xlane.xlu0 %1209
  %1211 = vmax.xlane.f32.xlu0 %v1070
  %v1212 = vpop.xlane.xlu0 %1211
  %1213 = vmax.xlane.f32.xlu0 %v1075
  %v1214 = vpop.xlane.xlu0 %1213
  %1215 = vmax.xlane.f32.xlu0 %v1078
  %v1216 = vpop.xlane.xlu0 %1215
  %1217 = vmax.xlane.f32.xlu0 %v1083
  %v1218 = vpop.xlane.xlu0 %1217
  %1219 = vmax.xlane.f32.xlu0 %v1086
  %v1220 = vpop.xlane.xlu0 %1219
  %1221 = vmax.xlane.f32.xlu0 %v1091
  %v1222 = vpop.xlane.xlu0 %1221
  %1223 = vmax.xlane.f32.xlu0 %v1094
  %v1224 = vpop.xlane.xlu0 %1223
  %1225 = vmax.xlane.f32.xlu0 %v1099
  %v1226 = vpop.xlane.xlu0 %1225
  %1227 = vmax.xlane.f32.xlu0 %v1102
  %v1228 = vpop.xlane.xlu0 %1227
  %1229 = vmax.xlane.f32.xlu0 %v1107
  %v1230 = vpop.xlane.xlu0 %1229
  %1231 = vmax.xlane.f32.xlu0 %v1110
  %v1232 = vpop.xlane.xlu0 %1231
  %1233 = vmax.xlane.f32.xlu0 %v1115
  %v1234 = vpop.xlane.xlu0 %1233
  %1235 = vmax.xlane.f32.xlu0 %v1118
  %v1236 = vpop.xlane.xlu0 %1235
  %1237 = vmax.xlane.f32.xlu0 %v1123
  %v1238 = vpop.xlane.xlu0 %1237
  %1239 = vmax.xlane.f32.xlu0 %v1126
  %v1240 = vpop.xlane.xlu0 %1239
  %1241 = vmax.xlane.f32.xlu0 %v1131
  %v1242 = vpop.xlane.xlu0 %1241
  %1243 = vmax.xlane.f32.xlu0 %v1134
  %v1244 = vpop.xlane.xlu0 %1243
  %1245 = vmax.xlane.f32.xlu0 %v1139
  %v1246 = vpop.xlane.xlu0 %1245
  %1247 = vmax.xlane.f32.xlu0 %v1142
  %v1248 = vpop.xlane.xlu0 %1247
  %1249 = vmax.xlane.f32.xlu0 %v1147
  %v1250 = vpop.xlane.xlu0 %1249
  %1251 = vmax.xlane.f32.xlu0 %v1150
  %v1252 = vpop.xlane.xlu0 %1251
  %1253 = vmax.xlane.f32.xlu0 %v1155
  %v1254 = vpop.xlane.xlu0 %1253
  %1255 = vmax.xlane.f32.xlu0 %v1158
  %v1256 = vpop.xlane.xlu0 %1255
  %1257 = vmax.xlane.f32.xlu0 %v1163
  %v1258 = vpop.xlane.xlu0 %1257
  %1259 = vmax.xlane.f32.xlu0 %v1166
  %v1260 = vpop.xlane.xlu0 %1259
  %1261 = vmax.xlane.f32.xlu0 %v1171
  %v1262 = vpop.xlane.xlu0 %1261
  %1263 = vmax.xlane.f32.xlu0 %v1174
  %v1264 = vpop.xlane.xlu0 %1263
  %1265 = vmax.xlane.f32.xlu0 %v1179
  %v1266 = vpop.xlane.xlu0 %1265
  %1267 = vmax.xlane.f32.xlu0 %v1182
  %v1268 = vpop.xlane.xlu0 %1267
  %1269 = vmax.xlane.f32.xlu0 %v1187
  %v1270 = vpop.xlane.xlu0 %1269
  %1271 = vmax.xlane.f32.xlu0 %v1190
  %v1272 = vpop.xlane.xlu0 %1271
  %1273 = vmax.xlane.f32.xlu0 %v1195
  %v1274 = vpop.xlane.xlu0 %1273
  %vm1275 = vcmask 1043456
  %v1276 = vsel %vm1275, %v1198, -inf
  %1277 = vmax.xlane.f32.xlu0 %v1276
  %v1278 = vpop.xlane.xlu0 %1277
  %v1279 = vsub.f32 %v1051, %v1202
  %v1280 = vsub.f32 %v1054, %v1204
  %v1281 = vsub.f32 %v1059, %v1206
  %v1282 = vsub.f32 %v1062, %v1208
  %v1283 = vsub.f32 %v1067, %v1210
  %v1284 = vsub.f32 %v1070, %v1212
  %v1285 = vsub.f32 %v1075, %v1214
  %v1286 = vsub.f32 %v1078, %v1216
  %v1287 = vsub.f32 %v1083, %v1218
  %v1288 = vsub.f32 %v1086, %v1220
  %v1289 = vsub.f32 %v1091, %v1222
  %v1290 = vsub.f32 %v1094, %v1224
  %v1291 = vsub.f32 %v1099, %v1226
  %v1292 = vsub.f32 %v1102, %v1228
  %v1293 = vsub.f32 %v1107, %v1230
  %v1294 = vsub.f32 %v1110, %v1232
  %v1295 = vsub.f32 %v1115, %v1234
  %v1296 = vsub.f32 %v1118, %v1236
  %v1297 = vsub.f32 %v1123, %v1238
  %v1298 = vsub.f32 %v1126, %v1240
  %v1299 = vsub.f32 %v1131, %v1242
  %v1300 = vsub.f32 %v1134, %v1244
  %v1301 = vsub.f32 %v1139, %v1246
  %v1302 = vsub.f32 %v1142, %v1248
  %v1303 = vsub.f32 %v1147, %v1250
  %v1304 = vsub.f32 %v1150, %v1252
  %v1305 = vsub.f32 %v1155, %v1254
  %v1306 = vsub.f32 %v1158, %v1256
  %v1307 = vsub.f32 %v1163, %v1258
  %v1308 = vsub.f32 %v1166, %v1260
  %v1309 = vsub.f32 %v1171, %v1262
  %v1310 = vsub.f32 %v1174, %v1264
  %v1311 = vsub.f32 %v1179, %v1266
  %v1312 = vsub.f32 %v1182, %v1268
  %v1313 = vsub.f32 %v1187, %v1270
  %v1314 = vsub.f32 %v1190, %v1272
  %v1315 = vsub.f32 %v1195, %v1274
  %v1316 = vsub.f32 %v1198, %v1278
  %v1317 = vmul.f32 %v1279, 1.442695
  %v1318 = vpow.pop %v1317
  %v1319 = vmul.f32 %v1280, 1.442695
  %v1320 = vpow.pop %v1319
  %v1321 = vmul.f32 %v1281, 1.442695
  %v1322 = vpow.pop %v1321
  %v1323 = vmul.f32 %v1282, 1.442695
  %v1324 = vpow.pop %v1323
  %v1325 = vmul.f32 %v1283, 1.442695
  %v1326 = vpow.pop %v1325
  %v1327 = vmul.f32 %v1284, 1.442695
  %v1328 = vpow.pop %v1327
  %v1329 = vmul.f32 %v1285, 1.442695
  %v1330 = vpow.pop %v1329
  %v1331 = vmul.f32 %v1286, 1.442695
  %v1332 = vpow.pop %v1331
  %v1333 = vmul.f32 %v1287, 1.442695
  %v1334 = vpow.pop %v1333
  %v1335 = vmul.f32 %v1288, 1.442695
  %v1336 = vpow.pop %v1335
  %v1337 = vmul.f32 %v1289, 1.442695
  %v1338 = vpow.pop %v1337
  %v1339 = vmul.f32 %v1290, 1.442695
  %v1340 = vpow.pop %v1339
  %v1341 = vmul.f32 %v1291, 1.442695
  %v1342 = vpow.pop %v1341
  %v1343 = vmul.f32 %v1292, 1.442695
  %v1344 = vpow.pop %v1343
  %v1345 = vmul.f32 %v1293, 1.442695
  %v1346 = vpow.pop %v1345
  %v1347 = vmul.f32 %v1294, 1.442695
  %v1348 = vpow.pop %v1347
  %v1349 = vmul.f32 %v1295, 1.442695
  %v1350 = vpow.pop %v1349
  %v1351 = vmul.f32 %v1296, 1.442695
  %v1352 = vpow.pop %v1351
  %v1353 = vmul.f32 %v1297, 1.442695
  %v1354 = vpow.pop %v1353
  %v1355 = vmul.f32 %v1298, 1.442695
  %v1356 = vpow.pop %v1355
  %v1357 = vmul.f32 %v1299, 1.442695
  %v1358 = vpow.pop %v1357
  %v1359 = vmul.f32 %v1300, 1.442695
  %v1360 = vpow.pop %v1359
  %v1361 = vmul.f32 %v1301, 1.442695
  %v1362 = vpow.pop %v1361
  %v1363 = vmul.f32 %v1302, 1.442695
  %v1364 = vpow.pop %v1363
  %v1365 = vmul.f32 %v1303, 1.442695
  %v1366 = vpow.pop %v1365
  %v1367 = vmul.f32 %v1304, 1.442695
  %v1368 = vpow.pop %v1367
  %v1369 = vmul.f32 %v1305, 1.442695
  %v1370 = vpow.pop %v1369
  %v1371 = vmul.f32 %v1306, 1.442695
  %v1372 = vpow.pop %v1371
  %v1373 = vmul.f32 %v1307, 1.442695
  %v1374 = vpow.pop %v1373
  %v1375 = vmul.f32 %v1308, 1.442695
  %v1376 = vpow.pop %v1375
  %v1377 = vmul.f32 %v1309, 1.442695
  %v1378 = vpow.pop %v1377
  %v1379 = vmul.f32 %v1310, 1.442695
  %v1380 = vpow.pop %v1379
  %v1381 = vmul.f32 %v1311, 1.442695
  %v1382 = vpow.pop %v1381
  %v1383 = vmul.f32 %v1312, 1.442695
  %v1384 = vpow.pop %v1383
  %v1385 = vmul.f32 %v1313, 1.442695
  %v1386 = vpow.pop %v1385
  %v1387 = vmul.f32 %v1314, 1.442695
  %v1388 = vpow.pop %v1387
  %v1389 = vmul.f32 %v1315, 1.442695
  %v1390 = vpow.pop %v1389
  %v1391 = vmul.f32 %v1316, 1.442695
  %v1392 = vpow.pop %v1391
  %1393 = vadd.xlane.f32.xlu0 %v1318
  %v1394 = vpop.xlane.xlu0 %1393
  %1395 = vadd.xlane.f32.xlu0 %v1320
  %v1396 = vpop.xlane.xlu0 %1395
  %1397 = vadd.xlane.f32.xlu0 %v1322
  %v1398 = vpop.xlane.xlu0 %1397
  %1399 = vadd.xlane.f32.xlu0 %v1324
  %v1400 = vpop.xlane.xlu0 %1399
  %1401 = vadd.xlane.f32.xlu0 %v1326
  %v1402 = vpop.xlane.xlu0 %1401
  %1403 = vadd.xlane.f32.xlu0 %v1328
  %v1404 = vpop.xlane.xlu0 %1403
  %1405 = vadd.xlane.f32.xlu0 %v1330
  %v1406 = vpop.xlane.xlu0 %1405
  %1407 = vadd.xlane.f32.xlu0 %v1332
  %v1408 = vpop.xlane.xlu0 %1407
  %1409 = vadd.xlane.f32.xlu0 %v1334
  %v1410 = vpop.xlane.xlu0 %1409
  %1411 = vadd.xlane.f32.xlu0 %v1336
  %v1412 = vpop.xlane.xlu0 %1411
  %1413 = vadd.xlane.f32.xlu0 %v1338
  %v1414 = vpop.xlane.xlu0 %1413
  %1415 = vadd.xlane.f32.xlu0 %v1340
  %v1416 = vpop.xlane.xlu0 %1415
  %1417 = vadd.xlane.f32.xlu0 %v1342
  %v1418 = vpop.xlane.xlu0 %1417
  %1419 = vadd.xlane.f32.xlu0 %v1344
  %v1420 = vpop.xlane.xlu0 %1419
  %1421 = vadd.xlane.f32.xlu0 %v1346
  %v1422 = vpop.xlane.xlu0 %1421
  %1423 = vadd.xlane.f32.xlu0 %v1348
  %v1424 = vpop.xlane.xlu0 %1423
  %1425 = vadd.xlane.f32.xlu0 %v1350
  %v1426 = vpop.xlane.xlu0 %1425
  %1427 = vadd.xlane.f32.xlu0 %v1352
  %v1428 = vpop.xlane.xlu0 %1427
  %1429 = vadd.xlane.f32.xlu0 %v1354
  %v1430 = vpop.xlane.xlu0 %1429
  %1431 = vadd.xlane.f32.xlu0 %v1356
  %v1432 = vpop.xlane.xlu0 %1431
  %1433 = vadd.xlane.f32.xlu0 %v1358
  %v1434 = vpop.xlane.xlu0 %1433
  %1435 = vadd.xlane.f32.xlu0 %v1360
  %v1436 = vpop.xlane.xlu0 %1435
  %1437 = vadd.xlane.f32.xlu0 %v1362
  %v1438 = vpop.xlane.xlu0 %1437
  %1439 = vadd.xlane.f32.xlu0 %v1364
  %v1440 = vpop.xlane.xlu0 %1439
  %1441 = vadd.xlane.f32.xlu0 %v1366
  %v1442 = vpop.xlane.xlu0 %1441
  %1443 = vadd.xlane.f32.xlu0 %v1368
  %v1444 = vpop.xlane.xlu0 %1443
  %1445 = vadd.xlane.f32.xlu0 %v1370
  %v1446 = vpop.xlane.xlu0 %1445
  %1447 = vadd.xlane.f32.xlu0 %v1372
  %v1448 = vpop.xlane.xlu0 %1447
  %1449 = vadd.xlane.f32.xlu0 %v1374
  %v1450 = vpop.xlane.xlu0 %1449
  %1451 = vadd.xlane.f32.xlu0 %v1376
  %v1452 = vpop.xlane.xlu0 %1451
  %1453 = vadd.xlane.f32.xlu0 %v1378
  %v1454 = vpop.xlane.xlu0 %1453
  %1455 = vadd.xlane.f32.xlu0 %v1380
  %v1456 = vpop.xlane.xlu0 %1455
  %1457 = vadd.xlane.f32.xlu0 %v1382
  %v1458 = vpop.xlane.xlu0 %1457
  %1459 = vadd.xlane.f32.xlu0 %v1384
  %v1460 = vpop.xlane.xlu0 %1459
  %1461 = vadd.xlane.f32.xlu0 %v1386
  %v1462 = vpop.xlane.xlu0 %1461
  %1463 = vadd.xlane.f32.xlu0 %v1388
  %v1464 = vpop.xlane.xlu0 %1463
  %1465 = vadd.xlane.f32.xlu0 %v1390
  %v1466 = vpop.xlane.xlu0 %1465
  %v1467 = vsel %vm1275, %v1392, 0.0
  %1468 = vadd.xlane.f32.xlu0 %v1467
  %v1469 = vpop.xlane.xlu0 %1468
  %v1470 = vlog2.pop %v1394
  %v1471 = vmul.f32 %v1470, 0.6931472
  %v1472 = vlog2.pop %v1396
  %v1473 = vmul.f32 %v1472, 0.6931472
  %v1474 = vlog2.pop %v1398
  %v1475 = vmul.f32 %v1474, 0.6931472
  %v1476 = vlog2.pop %v1400
  %v1477 = vmul.f32 %v1476, 0.6931472
  %v1478 = vlog2.pop %v1402
  %v1479 = vmul.f32 %v1478, 0.6931472
  %v1480 = vlog2.pop %v1404
  %v1481 = vmul.f32 %v1480, 0.6931472
  %v1482 = vlog2.pop %v1406
  %v1483 = vmul.f32 %v1482, 0.6931472
  %v1484 = vlog2.pop %v1408
  %v1485 = vmul.f32 %v1484, 0.6931472
  %v1486 = vlog2.pop %v1410
  %v1487 = vmul.f32 %v1486, 0.6931472
  %v1488 = vlog2.pop %v1412
  %v1489 = vmul.f32 %v1488, 0.6931472
  %v1490 = vlog2.pop %v1414
  %v1491 = vmul.f32 %v1490, 0.6931472
  %v1492 = vlog2.pop %v1416
  %v1493 = vmul.f32 %v1492, 0.6931472
  %v1494 = vlog2.pop %v1418
  %v1495 = vmul.f32 %v1494, 0.6931472
  %v1496 = vlog2.pop %v1420
  %v1497 = vmul.f32 %v1496, 0.6931472
  %v1498 = vlog2.pop %v1422
  %v1499 = vmul.f32 %v1498, 0.6931472
  %v1500 = vlog2.pop %v1424
  %v1501 = vmul.f32 %v1500, 0.6931472
  %v1502 = vlog2.pop %v1426
  %v1503 = vmul.f32 %v1502, 0.6931472
  %v1504 = vlog2.pop %v1428
  %v1505 = vmul.f32 %v1504, 0.6931472
  %v1506 = vlog2.pop %v1430
  %v1507 = vmul.f32 %v1506, 0.6931472
  %v1508 = vlog2.pop %v1432
  %v1509 = vmul.f32 %v1508, 0.6931472
  %v1510 = vlog2.pop %v1434
  %v1511 = vmul.f32 %v1510, 0.6931472
  %v1512 = vlog2.pop %v1436
  %v1513 = vmul.f32 %v1512, 0.6931472
  %v1514 = vlog2.pop %v1438
  %v1515 = vmul.f32 %v1514, 0.6931472
  %v1516 = vlog2.pop %v1440
  %v1517 = vmul.f32 %v1516, 0.6931472
  %v1518 = vlog2.pop %v1442
  %v1519 = vmul.f32 %v1518, 0.6931472
  %v1520 = vlog2.pop %v1444
  %v1521 = vmul.f32 %v1520, 0.6931472
  %v1522 = vlog2.pop %v1446
  %v1523 = vmul.f32 %v1522, 0.6931472
  %v1524 = vlog2.pop %v1448
  %v1525 = vmul.f32 %v1524, 0.6931472
  %v1526 = vlog2.pop %v1450
  %v1527 = vmul.f32 %v1526, 0.6931472
  %v1528 = vlog2.pop %v1452
  %v1529 = vmul.f32 %v1528, 0.6931472
  %v1530 = vlog2.pop %v1454
  %v1531 = vmul.f32 %v1530, 0.6931472
  %v1532 = vlog2.pop %v1456
  %v1533 = vmul.f32 %v1532, 0.6931472
  %v1534 = vlog2.pop %v1458
  %v1535 = vmul.f32 %v1534, 0.6931472
  %v1536 = vlog2.pop %v1460
  %v1537 = vmul.f32 %v1536, 0.6931472
  %v1538 = vlog2.pop %v1462
  %v1539 = vmul.f32 %v1538, 0.6931472
  %v1540 = vlog2.pop %v1464
  %v1541 = vmul.f32 %v1540, 0.6931472
  %v1542 = vlog2.pop %v1466
  %v1543 = vmul.f32 %v1542, 0.6931472
  %v1544 = vlog2.pop %v1469
  %v1545 = vmul.f32 %v1544, 0.6931472
  %v1546 = vsub.f32 %v1279, %v1471
  %v1547 = vsub.f32 %v1280, %v1473
  %v1548 = vsub.f32 %v1281, %v1475
  %v1549 = vsub.f32 %v1282, %v1477
  %v1550 = vsub.f32 %v1283, %v1479
  %v1551 = vsub.f32 %v1284, %v1481
  %v1552 = vsub.f32 %v1285, %v1483
  %v1553 = vsub.f32 %v1286, %v1485
  %v1554 = vsub.f32 %v1287, %v1487
  %v1555 = vsub.f32 %v1288, %v1489
  %v1556 = vsub.f32 %v1289, %v1491
  %v1557 = vsub.f32 %v1290, %v1493
  %v1558 = vsub.f32 %v1291, %v1495
  %v1559 = vsub.f32 %v1292, %v1497
  %v1560 = vsub.f32 %v1293, %v1499
  %v1561 = vsub.f32 %v1294, %v1501
  %v1562 = vsub.f32 %v1295, %v1503
  %v1563 = vsub.f32 %v1296, %v1505
  %v1564 = vsub.f32 %v1297, %v1507
  %v1565 = vsub.f32 %v1298, %v1509
  %v1566 = vsub.f32 %v1299, %v1511
  %v1567 = vsub.f32 %v1300, %v1513
  %v1568 = vsub.f32 %v1301, %v1515
  %v1569 = vsub.f32 %v1302, %v1517
  %v1570 = vsub.f32 %v1303, %v1519
  %v1571 = vsub.f32 %v1304, %v1521
  %v1572 = vsub.f32 %v1305, %v1523
  %v1573 = vsub.f32 %v1306, %v1525
  %v1574 = vsub.f32 %v1307, %v1527
  %v1575 = vsub.f32 %v1308, %v1529
  %v1576 = vsub.f32 %v1309, %v1531
  %v1577 = vsub.f32 %v1310, %v1533
  %v1578 = vsub.f32 %v1311, %v1535
  %v1579 = vsub.f32 %v1312, %v1537
  %v1580 = vsub.f32 %v1313, %v1539
  %v1581 = vsub.f32 %v1314, %v1541
  %v1582 = vsub.f32 %v1315, %v1543
  %v1583 = vsub.f32 %v1316, %v1545
  %v1584 = vpack.c.bf16 %v1547, %v1546
  %v1585 = vpack.c.bf16 %v1549, %v1548
  %v1586 = vpack.c.bf16 %v1551, %v1550
  %v1587 = vpack.c.bf16 %v1553, %v1552
  %v1588 = vpack.c.bf16 %v1555, %v1554
  %v1589 = vpack.c.bf16 %v1557, %v1556
  %v1590 = vpack.c.bf16 %v1559, %v1558
  %v1591 = vpack.c.bf16 %v1561, %v1560
  %v1592 = vpack.c.bf16 %v1563, %v1562
  %v1593 = vpack.c.bf16 %v1565, %v1564
  %v1594 = vpack.c.bf16 %v1567, %v1566
  %v1595 = vpack.c.bf16 %v1569, %v1568
  %v1596 = vpack.c.bf16 %v1571, %v1570
  %v1597 = vpack.c.bf16 %v1573, %v1572
  %v1598 = vpack.c.bf16 %v1575, %v1574
  %v1599 = vpack.c.bf16 %v1577, %v1576
  %v1600 = vpack.c.bf16 %v1579, %v1578
  %v1601 = vpack.c.bf16 %v1581, %v1580
  %v1602 = vpack.c.bf16 %v1583, %v1582
  %v1622 = vunpack.c.l.b16 %v1584
  %v1623 = vunpack.c.h.b16 %v1584
  %v1624 = vunpack.c.l.b16 %v1585
  %v1625 = vunpack.c.h.b16 %v1585
  %v1626 = vunpack.c.l.b16 %v1586
  %v1627 = vunpack.c.h.b16 %v1586
  %v1628 = vunpack.c.l.b16 %v1587
  %v1629 = vunpack.c.h.b16 %v1587
  %v1630 = vunpack.c.l.b16 %v1588
  %v1631 = vunpack.c.h.b16 %v1588
  %v1632 = vunpack.c.l.b16 %v1589
  %v1633 = vunpack.c.h.b16 %v1589
  %v1634 = vunpack.c.l.b16 %v1590
  %v1635 = vunpack.c.h.b16 %v1590
  %v1636 = vunpack.c.l.b16 %v1591
  %v1637 = vunpack.c.h.b16 %v1591
  %v1638 = vunpack.c.l.b16 %v1592
  %v1639 = vunpack.c.h.b16 %v1592
  %v1640 = vunpack.c.l.b16 %v1593
  %v1641 = vunpack.c.h.b16 %v1593
  %v1642 = vunpack.c.l.b16 %v1594
  %v1643 = vunpack.c.h.b16 %v1594
  %v1644 = vunpack.c.l.b16 %v1595
  %v1645 = vunpack.c.h.b16 %v1595
  %v1646 = vunpack.c.l.b16 %v1596
  %v1647 = vunpack.c.h.b16 %v1596
  %v1648 = vunpack.c.l.b16 %v1597
  %v1649 = vunpack.c.h.b16 %v1597
  %v1650 = vunpack.c.l.b16 %v1598
  %v1651 = vunpack.c.h.b16 %v1598
  %v1652 = vunpack.c.l.b16 %v1599
  %v1653 = vunpack.c.h.b16 %v1599
  %v1654 = vunpack.c.l.b16 %v1600
  %v1655 = vunpack.c.h.b16 %v1600
  %v1656 = vunpack.c.l.b16 %v1601
  %v1657 = vunpack.c.h.b16 %v1601
  %v1658 = vunpack.c.l.b16 %v1602
  %v1659 = vunpack.c.h.b16 %v1602
  %v1660 = vpack.c.b16 %v1622, %v1622
  %v1661 = vpack.c.b16 %v1623, %v1623
  %v1662 = vpack.c.b16 %v1624, %v1624
  %v1663 = vpack.c.b16 %v1625, %v1625
  %v1664 = vpack.c.b16 %v1626, %v1626
  %v1665 = vpack.c.b16 %v1627, %v1627
  %v1666 = vpack.c.b16 %v1628, %v1628
  %v1667 = vpack.c.b16 %v1629, %v1629
  %v1668 = vpack.c.b16 %v1630, %v1630
  %v1669 = vpack.c.b16 %v1631, %v1631
  %v1670 = vpack.c.b16 %v1632, %v1632
  %v1671 = vpack.c.b16 %v1633, %v1633
  %v1672 = vpack.c.b16 %v1634, %v1634
  %v1673 = vpack.c.b16 %v1635, %v1635
  %v1674 = vpack.c.b16 %v1636, %v1636
  %v1675 = vpack.c.b16 %v1637, %v1637
  %v1676 = vpack.c.b16 %v1638, %v1638
  %v1677 = vpack.c.b16 %v1639, %v1639
  %v1678 = vpack.c.b16 %v1640, %v1640
  %v1679 = vpack.c.b16 %v1641, %v1641
  %v1680 = vpack.c.b16 %v1642, %v1642
  %v1681 = vpack.c.b16 %v1643, %v1643
  %v1682 = vpack.c.b16 %v1644, %v1644
  %v1683 = vpack.c.b16 %v1645, %v1645
  %v1684 = vpack.c.b16 %v1646, %v1646
  %v1685 = vpack.c.b16 %v1647, %v1647
  %v1686 = vpack.c.b16 %v1648, %v1648
  %v1687 = vpack.c.b16 %v1649, %v1649
  %v1688 = vpack.c.b16 %v1650, %v1650
  %v1689 = vpack.c.b16 %v1651, %v1651
  %v1690 = vpack.c.b16 %v1652, %v1652
  %v1691 = vpack.c.b16 %v1653, %v1653
  %v1692 = vpack.c.b16 %v1654, %v1654
  %v1693 = vpack.c.b16 %v1655, %v1655
  %v1694 = vpack.c.b16 %v1656, %v1656
  %v1695 = vpack.c.b16 %v1657, %v1657
  %v1696 = vpack.c.b16 %v1658, %v1658
  %v1697 = vpack.c.b16 %v1659, %v1659
  %1736 = vst [vmem:[%s7] sm:$0xf] %v1660
  %1737 = vst [vmem:[%s7 + $0x4] sm:$0xf] %v1661
  %1738 = vst [vmem:[%s7 + $0x8] sm:$0xf] %v1662
  %1739 = vst [vmem:[%s7 + $0xc] sm:$0xf] %v1663
  %1740 = vst [vmem:[%s7 + $0x10] sm:$0xf] %v1664
  %1741 = vst [vmem:[%s7 + $0x14] sm:$0xf] %v1665
  %1742 = vst [vmem:[%s7 + $0x18] sm:$0xf] %v1666
  %1743 = vst [vmem:[%s7 + $0x1c] sm:$0xf] %v1667
  %1744 = vst [vmem:[%s7 + $0x20] sm:$0xf] %v1668
  %1745 = vst [vmem:[%s7 + $0x24] sm:$0xf] %v1669
  %1746 = vst [vmem:[%s7 + $0x28] sm:$0xf] %v1670
  %1747 = vst [vmem:[%s7 + $0x2c] sm:$0xf] %v1671
  %1748 = vst [vmem:[%s7 + $0x30] sm:$0xf] %v1672
  %1749 = vst [vmem:[%s7 + $0x34] sm:$0xf] %v1673
  %1750 = vst [vmem:[%s7 + $0x38] sm:$0xf] %v1674
  %1751 = vst [vmem:[%s7 + $0x3c] sm:$0xf] %v1675
  %1752 = vst [vmem:[%s7 + $0x40] sm:$0xf] %v1676
  %1753 = vst [vmem:[%s7 + $0x44] sm:$0xf] %v1677
  %1754 = vst [vmem:[%s7 + $0x48] sm:$0xf] %v1678
  %1755 = vst [vmem:[%s7 + $0x4c] sm:$0xf] %v1679
  %1756 = vst [vmem:[%s7 + $0x50] sm:$0xf] %v1680
  %1757 = vst [vmem:[%s7 + $0x54] sm:$0xf] %v1681
  %1758 = vst [vmem:[%s7 + $0x58] sm:$0xf] %v1682
  %1759 = vst [vmem:[%s7 + $0x5c] sm:$0xf] %v1683
  %1760 = vst [vmem:[%s7 + $0x60] sm:$0xf] %v1684
  %1761 = vst [vmem:[%s7 + $0x64] sm:$0xf] %v1685
  %1762 = vst [vmem:[%s7 + $0x68] sm:$0xf] %v1686
  %1763 = vst [vmem:[%s7 + $0x6c] sm:$0xf] %v1687
  %1764 = vst [vmem:[%s7 + $0x70] sm:$0xf] %v1688
  %1765 = vst [vmem:[%s7 + $0x74] sm:$0xf] %v1689
  %1766 = vst [vmem:[%s7 + $0x78] sm:$0xf] %v1690
  %1767 = vst [vmem:[%s7 + $0x7c] sm:$0xf] %v1691
  %1768 = vst [vmem:[%s7 + $0x80] sm:$0xf] %v1692
  %1769 = vst [vmem:[%s7 + $0x84] sm:$0xf] %v1693
  %1770 = vst [vmem:[%s7 + $0x88] sm:$0xf] %v1694
  %1771 = vst [vmem:[%s7 + $0x8c] sm:$0xf] %v1695
  %1772 = vst [vmem:[%s7 + $0x90] sm:$0xf] %v1696
  %1773 = vst [vmem:[%s7 + $0x94] sm:$0x3] %v1697
  // Predicated region
  $region30: #{ffnn_forward.1} parent=0 // pred_check
    _
  $region31: #{ffnn_forward.1} parent=0 // pred_check_branch
    %1775 = sbr.rel (0) target = $region33
  $region32: #{ffnn_forward.1} parent=0 // pred_region
    _
  $region33: #{ffnn_forward.1} parent=0 // pred_fallthru
    _
  // Predicated region
  $region34: #{ffnn_forward.1} parent=0 // pred_check
    _
  $region35: #{ffnn_forward.1} parent=0 // pred_check_branch
    %1777 = sbr.rel (0) target = $region37
  $region36: #{ffnn_forward.1} parent=0 // pred_region
    _
  $region37: #{ffnn_forward.1} parent=0 // pred_fallthru
    _

</llo_original>
